<compile_context>
chip_gen: v5e
topology: v5e:2x2
jax: 0.10.0
libtpu: 0.0.40
codegen_flags: <defaults>
</compile_context>

<pallas_src>
import math
import jax
import jax.numpy as jnp
from jax.experimental import pallas as pl
from jax.experimental.pallas import tpu as pltpu

# Small synthetic config (embedding_size % num_heads == 0, seq == max_sequence_length).
B, H, E, S = 2, 4, 32, 16
DH = E // H
SCALE = 1.0 / math.sqrt(DH)

# Separability conditions for folding the head-split permutation into the weights.
assert E % S == 0 and S % DH == 0
N_OFF = E // S            # number of distinct column-selection patterns (=2 here)


# ---------------- Fused Pallas kernel (whole forward pass, one grid step) ----------------

def fused_sparse_attention_kernel(xq_ref, xk_ref, xv_ref,
                                  wsq_ref, wsk_ref, wsv_ref,
                                  bsq_ref, bsk_ref, bsv_ref,
                                  wo_ref, bo_ref, negb_ref, mask_ref,
                                  o_ref):
    neg_bias = negb_ref[...]        # (S, S): 0 where present, -1e30 where absent
    mask = mask_ref[...]            # (S, S) in {0., 1.}

    # Q/K/V projections fused with the head column selection (and scale for Q):
    #   y*[off][r, t] = (x @ W^T + b)[r, t*N_OFF + off]
    yq = [jnp.dot(xq_ref[...], wsq_ref[off], preferred_element_type=jnp.float32) + bsq_ref[off]
          for off in range(N_OFF)]
    yk = [jnp.dot(xk_ref[...], wsk_ref[off], preferred_element_type=jnp.float32) + bsk_ref[off]
          for off in range(N_OFF)]
    yv = [jnp.dot(xv_ref[...], wsv_ref[off], preferred_element_type=jnp.float32) + bsv_ref[off]
          for off in range(N_OFF)]

    for b in range(B):                              # static unroll: B*H tiny attention blocks
        acc = jnp.zeros((E, S), jnp.float32)        # this batch's output, already (E, S) transposed
        for h in range(H):
            off = (h * DH) // S
            r0 = b * S + (h * DH) % S
            q_dt = yq[off][r0:r0 + DH, :]           # (DH, S) == q3[b*H+h].T  (scale pre-applied)
            k_dt = yk[off][r0:r0 + DH, :]
            v_dt = yv[off][r0:r0 + DH, :]

            # SDDMM: masked scores via additive bias (no select needed).
            s = jnp.dot(q_dt.T, k_dt, preferred_element_type=jnp.float32) + neg_bias   # (S, S)

            # sparse_softmax: softmax over present entries; empty rows -> all-zero rows.
            m_row = jnp.max(s, axis=-1, keepdims=True)
            p = jnp.exp(s - m_row) * mask
            denom = jnp.sum(p, axis=-1, keepdims=True)
            w = p * pl.reciprocal(jnp.where(denom > 0.0, denom, 1.0), approx=True)

            # SpMM + head merge + output projection, accumulated directly in the
            # transposed (E, S) layout:  out3[i, d] = sum_j w[i, j] * v3[j, d].
            out_dt = jnp.dot(v_dt, w.T, preferred_element_type=jnp.float32)             # (DH, S)
            acc = acc + jnp.dot(wo_ref[h], out_dt, preferred_element_type=jnp.float32)  # (E, S)
        o_ref[b] = acc + bo_ref[...]                # (E, S) + (E, 1) broadcast


def sparse_attention_forward(params, query, key, value):
    b, s, e = query.shape
    xq = query.reshape(b * s, e)                    # metadata-only reshapes, no data movement
    xk = key.reshape(b * s, e)
    xv = value.reshape(b * s, e)

    def full(shape):
        return pl.BlockSpec(shape, lambda i, _s=shape: (0,) * len(_s))

    return pl.pallas_call(
        fused_sparse_attention_kernel,
        out_shape=jax.ShapeDtypeStruct((b, e, s), jnp.float32),
        grid=(1,),
        in_specs=[full((b * s, e)), full((b * s, e)), full((b * s, e)),
                  full((N_OFF, E, S)), full((N_OFF, E, S)), full((N_OFF, E, S)),
                  full((N_OFF, 1, S)), full((N_OFF, 1, S)), full((N_OFF, 1, S)),
                  full((H, E, DH)), full((E, 1)), full((S, S)), full((S, S))],
        out_specs=full((b, e, s)),
        compiler_params=pltpu.CompilerParams(dimension_semantics=("arbitrary",)),
    )(xq, xk, xv,
      params["wsel_q"], params["wsel_k"], params["wsel_v"],
      params["bsel_q"], params["bsel_k"], params["bsel_v"],
      params["wo_blocks"], params["bo_col"], params["neg_bias"], params["mask2d"])


# ---------------- Parameter setup (deterministic, in-script) ----------------

def make_sparsity_mask(rng_key, m, n, sparsity=0.9):
    # Mirrors generate_mask(): fixed zero/one counts (rounded to 4), shuffled.
    num_elements = m * n
    remainder = int(num_elements * sparsity) % 4
    num_zeros = int(num_elements * sparsity) - remainder
    num_ones = num_elements - num_zeros
    flat = jnp.concatenate([jnp.zeros((num_zeros,), jnp.float32),
                            jnp.ones((num_ones,), jnp.float32)])
    perm = jax.random.permutation(rng_key, num_elements)
    return flat[perm].reshape(m, n)


def init_raw_params(rng_key):
    # TODO(synk): SparseLinear definition is not provided; modeled as nn.Linear
    # (y = x @ W^T + b) with a deterministic 90%-sparse weight mask (functionally
    # equivalent to a sparse-weight matmul).
    keys = jax.random.split(rng_key, 9)
    bound = 1.0 / math.sqrt(E)
    Ws, bs = [], []
    for li in range(4):
        w = jax.random.uniform(keys[2 * li], (E, E), jnp.float32, -bound, bound)
        bias = jax.random.uniform(keys[2 * li + 1], (E,), jnp.float32, -bound, bound)
        wmask = make_sparsity_mask(jax.random.fold_in(keys[2 * li], 7), E, E, 0.9)
        Ws.append(w * wmask)
        bs.append(bias)
    mask2d = make_sparsity_mask(keys[8], S, S, sparsity=0.9)
    return Ws, bs, mask2d


def fold_params(Ws, bs, mask2d):
    """Precompute everything the fused kernel needs: the head-split column selection
    and the 1/sqrt(head_dim) scale are folded into the Q/K/V projection weights."""
    stride = N_OFF
    e_idx = jnp.arange(E)[:, None]
    t_idx = jnp.arange(S)[None, :]
    sels = [(e_idx == (t_idx * stride + off)).astype(jnp.float32)    # (E, S) 0/1 selection
            for off in range(stride)]
    scales = (SCALE, 1.0, 1.0)
    params = {}
    for name, p in zip(("q", "k", "v"), range(3)):
        wt = Ws[p].T * scales[p]                                     # (E, E)
        params[f"wsel_{name}"] = jnp.stack([wt @ sel for sel in sels])               # (N_OFF, E, S)
        params[f"bsel_{name}"] = jnp.stack([(bs[p] * scales[p]) @ sel
                                            for sel in sels])[:, None, :]            # (N_OFF, 1, S)
    params["wo_blocks"] = jnp.stack([Ws[3][:, h * DH:(h + 1) * DH] for h in range(H)])  # (H, E, DH)
    params["bo_col"] = bs[3][:, None]                                                    # (E, 1)
    params["neg_bias"] = (mask2d - 1.0) * 1e30
    params["mask2d"] = mask2d
    return params


# ---------------- Pure-JAX reference (numerical self-check only) ----------------

def reference_forward(Ws, bs, mask2d, query, key, value):
    b = query.shape[0]

    def proj_split(x, w, bias):
        y = x @ w.T + bias                                   # (B, S, E)
        t = jnp.transpose(y, (0, 2, 1))                      # .transpose(1,2).contiguous()
        t = t.reshape(b, -1, H, DH)                          # row-major == torch .view
        return jnp.transpose(t, (0, 2, 1, 3)).reshape(b * H, S, DH)

    q3 = proj_split(query, Ws[0], bs[0])
    k3 = proj_split(key, Ws[1], bs[1])
    v3 = proj_split(value, Ws[2], bs[2])
    s = jnp.einsum("rid,rjd->rij", q3, k3) / math.sqrt(DH)
    s = jnp.where(mask2d[None] > 0, s, -1e30)
    m = jnp.max(s, axis=-1, keepdims=True)
    p = jnp.exp(s - m) * mask2d[None]
    denom = jnp.sum(p, axis=-1, keepdims=True)
    w = p / jnp.where(denom > 0, denom, 1.0)
    out3 = jnp.einsum("rij,rjd->rid", w, v3)
    out4 = out3.reshape(b, H, S, DH)
    merged = jnp.transpose(out4, (0, 2, 1, 3)).reshape(b, S, H * DH)
    y = merged @ Ws[3].T + bs[3]
    return jnp.transpose(y, (0, 2, 1))                       # (B, E, S)


if __name__ == "__main__":
    root = jax.random.PRNGKey(0)
    kp, kq, kk, kv = jax.random.split(root, 4)
    Ws, bs, mask2d = init_raw_params(kp)
    params = fold_params(Ws, bs, mask2d)

    query = jax.random.normal(kq, (B, S, E), jnp.float32)
    key_in = jax.random.normal(kk, (B, S, E), jnp.float32)
    value = jax.random.normal(kv, (B, S, E), jnp.float32)

    out = jax.jit(sparse_attention_forward)(params, query, key_in, value)
    out = jax.block_until_ready(out)
    assert out.shape == (B, E, S) and out.dtype == jnp.float32

    ref = reference_forward(Ws, bs, mask2d, query, key_in, value)
    assert jnp.allclose(out, ref, rtol=1e-2, atol=1e-3), float(jnp.max(jnp.abs(out - ref)))
    print("KERNEL_OK")
</pallas_src>

<mosaic_0001>
module attributes {stable_mosaic.version = 11 : i64} {
  func.func @fused_sparse_attention_kernel(%arg0: i32, %arg1: memref<32x32xf32, #tpu.memory_space<vmem>>, %arg2: memref<32x32xf32, #tpu.memory_space<vmem>>, %arg3: memref<32x32xf32, #tpu.memory_space<vmem>>, %arg4: memref<2x32x16xf32, #tpu.memory_space<vmem>>, %arg5: memref<2x32x16xf32, #tpu.memory_space<vmem>>, %arg6: memref<2x32x16xf32, #tpu.memory_space<vmem>>, %arg7: memref<2x1x16xf32, #tpu.memory_space<vmem>>, %arg8: memref<2x1x16xf32, #tpu.memory_space<vmem>>, %arg9: memref<2x1x16xf32, #tpu.memory_space<vmem>>, %arg10: memref<4x32x8xf32, #tpu.memory_space<vmem>>, %arg11: memref<32x1xf32, #tpu.memory_space<vmem>>, %arg12: memref<16x16xf32, #tpu.memory_space<vmem>>, %arg13: memref<16x16xf32, #tpu.memory_space<vmem>>, %arg14: memref<2x32x16xf32, #tpu.memory_space<vmem>>) attributes {dimension_semantics = [#tpu.dimension_semantics<arbitrary>], iteration_bounds = array<i64: 1>, scalar_prefetch = 0 : i64, scratch_operands = 0 : i64, tpu.core_type = #tpu.core_type<tc>, window_params = [{pipeline_mode = #tpu.pipeline_mode<synchronous>, transform_indices = @transform_0, window_bounds = array<i64: 32, 32>}, {pipeline_mode = #tpu.pipeline_mode<synchronous>, transform_indices = @transform_1, window_bounds = array<i64: 32, 32>}, {pipeline_mode = #tpu.pipeline_mode<synchronous>, transform_indices = @transform_2, window_bounds = array<i64: 32, 32>}, {pipeline_mode = #tpu.pipeline_mode<synchronous>, transform_indices = @transform_3, window_bounds = array<i64: 2, 32, 16>}, {pipeline_mode = #tpu.pipeline_mode<synchronous>, transform_indices = @transform_4, window_bounds = array<i64: 2, 32, 16>}, {pipeline_mode = #tpu.pipeline_mode<synchronous>, transform_indices = @transform_5, window_bounds = array<i64: 2, 32, 16>}, {pipeline_mode = #tpu.pipeline_mode<synchronous>, transform_indices = @transform_6, window_bounds = array<i64: 2, 1, 16>}, {pipeline_mode = #tpu.pipeline_mode<synchronous>, transform_indices = @transform_7, window_bounds = array<i64: 2, 1, 16>}, {pipeline_mode = #tpu.pipeline_mode<synchronous>, transform_indices = @transform_8, window_bounds = array<i64: 2, 1, 16>}, {pipeline_mode = #tpu.pipeline_mode<synchronous>, transform_indices = @transform_9, window_bounds = array<i64: 4, 32, 8>}, {pipeline_mode = #tpu.pipeline_mode<synchronous>, transform_indices = @transform_10, window_bounds = array<i64: 32, 1>}, {pipeline_mode = #tpu.pipeline_mode<synchronous>, transform_indices = @transform_11, window_bounds = array<i64: 16, 16>}, {pipeline_mode = #tpu.pipeline_mode<synchronous>, transform_indices = @transform_12, window_bounds = array<i64: 16, 16>}, {pipeline_mode = #tpu.pipeline_mode<synchronous>, transform_indices = @transform_13, window_bounds = array<i64: 2, 32, 16>}]} {
    %c0 = arith.constant 0 : index
    %c0_0 = arith.constant 0 : index
    %0 = vector.load %arg12[%c0, %c0_0] : memref<16x16xf32, #tpu.memory_space<vmem>>, vector<16x16xf32>
    %c0_1 = arith.constant 0 : index
    %c0_2 = arith.constant 0 : index
    %1 = vector.load %arg13[%c0_1, %c0_2] : memref<16x16xf32, #tpu.memory_space<vmem>>, vector<16x16xf32>
    %c0_3 = arith.constant 0 : index
    %c0_4 = arith.constant 0 : index
    %2 = vector.load %arg1[%c0_3, %c0_4] : memref<32x32xf32, #tpu.memory_space<vmem>>, vector<32x32xf32>
    %c0_5 = arith.constant 0 : index
    %c0_6 = arith.constant 0 : index
    %c0_7 = arith.constant 0 : index
    %3 = vector.load %arg4[%c0_5, %c0_6, %c0_7] : memref<2x32x16xf32, #tpu.memory_space<vmem>>, vector<1x32x16xf32>
    %4 = vector.shape_cast %3 : vector<1x32x16xf32> to vector<32x16xf32>
    %cst = arith.constant dense<0.000000e+00> : vector<32x16xf32>
    %5 = tpu.matmul %2, %4, %cst {dimension_numbers = #tpu.dot_dimension_numbers<[1], [0], [0], [1], [0, 0, 1, 1], [], []>} : vector<32x32xf32>, vector<32x16xf32>, vector<32x16xf32> -> vector<32x16xf32>
    %c0_8 = arith.constant 0 : index
    %c0_9 = arith.constant 0 : index
    %c0_10 = arith.constant 0 : index
    %6 = vector.load %arg7[%c0_8, %c0_9, %c0_10] : memref<2x1x16xf32, #tpu.memory_space<vmem>>, vector<1x1x16xf32>
    %7 = vector.shape_cast %6 : vector<1x1x16xf32> to vector<1x16xf32>
    %8 = vector.broadcast %7 : vector<1x16xf32> to vector<32x16xf32>
    %9 = arith.addf %5, %8 : vector<32x16xf32>
    %c0_11 = arith.constant 0 : index
    %c0_12 = arith.constant 0 : index
    %10 = vector.load %arg1[%c0_11, %c0_12] : memref<32x32xf32, #tpu.memory_space<vmem>>, vector<32x32xf32>
    %c1 = arith.constant 1 : index
    %c0_13 = arith.constant 0 : index
    %c0_14 = arith.constant 0 : index
    %11 = vector.load %arg4[%c1, %c0_13, %c0_14] : memref<2x32x16xf32, #tpu.memory_space<vmem>>, vector<1x32x16xf32>
    %12 = vector.shape_cast %11 : vector<1x32x16xf32> to vector<32x16xf32>
    %cst_15 = arith.constant dense<0.000000e+00> : vector<32x16xf32>
    %13 = tpu.matmul %10, %12, %cst_15 {dimension_numbers = #tpu.dot_dimension_numbers<[1], [0], [0], [1], [0, 0, 1, 1], [], []>} : vector<32x32xf32>, vector<32x16xf32>, vector<32x16xf32> -> vector<32x16xf32>
    %c1_16 = arith.constant 1 : index
    %c0_17 = arith.constant 0 : index
    %c0_18 = arith.constant 0 : index
    %14 = vector.load %arg7[%c1_16, %c0_17, %c0_18] : memref<2x1x16xf32, #tpu.memory_space<vmem>>, vector<1x1x16xf32>
    %15 = vector.shape_cast %14 : vector<1x1x16xf32> to vector<1x16xf32>
    %16 = vector.broadcast %15 : vector<1x16xf32> to vector<32x16xf32>
    %17 = arith.addf %13, %16 : vector<32x16xf32>
    %c0_19 = arith.constant 0 : index
    %c0_20 = arith.constant 0 : index
    %18 = vector.load %arg2[%c0_19, %c0_20] : memref<32x32xf32, #tpu.memory_space<vmem>>, vector<32x32xf32>
    %c0_21 = arith.constant 0 : index
    %c0_22 = arith.constant 0 : index
    %c0_23 = arith.constant 0 : index
    %19 = vector.load %arg5[%c0_21, %c0_22, %c0_23] : memref<2x32x16xf32, #tpu.memory_space<vmem>>, vector<1x32x16xf32>
    %20 = vector.shape_cast %19 : vector<1x32x16xf32> to vector<32x16xf32>
    %cst_24 = arith.constant dense<0.000000e+00> : vector<32x16xf32>
    %21 = tpu.matmul %18, %20, %cst_24 {dimension_numbers = #tpu.dot_dimension_numbers<[1], [0], [0], [1], [0, 0, 1, 1], [], []>} : vector<32x32xf32>, vector<32x16xf32>, vector<32x16xf32> -> vector<32x16xf32>
    %c0_25 = arith.constant 0 : index
    %c0_26 = arith.constant 0 : index
    %c0_27 = arith.constant 0 : index
    %22 = vector.load %arg8[%c0_25, %c0_26, %c0_27] : memref<2x1x16xf32, #tpu.memory_space<vmem>>, vector<1x1x16xf32>
    %23 = vector.shape_cast %22 : vector<1x1x16xf32> to vector<1x16xf32>
    %24 = vector.broadcast %23 : vector<1x16xf32> to vector<32x16xf32>
    %25 = arith.addf %21, %24 : vector<32x16xf32>
    %c0_28 = arith.constant 0 : index
    %c0_29 = arith.constant 0 : index
    %26 = vector.load %arg2[%c0_28, %c0_29] : memref<32x32xf32, #tpu.memory_space<vmem>>, vector<32x32xf32>
    %c1_30 = arith.constant 1 : index
    %c0_31 = arith.constant 0 : index
    %c0_32 = arith.constant 0 : index
    %27 = vector.load %arg5[%c1_30, %c0_31, %c0_32] : memref<2x32x16xf32, #tpu.memory_space<vmem>>, vector<1x32x16xf32>
    %28 = vector.shape_cast %27 : vector<1x32x16xf32> to vector<32x16xf32>
    %cst_33 = arith.constant dense<0.000000e+00> : vector<32x16xf32>
    %29 = tpu.matmul %26, %28, %cst_33 {dimension_numbers = #tpu.dot_dimension_numbers<[1], [0], [0], [1], [0, 0, 1, 1], [], []>} : vector<32x32xf32>, vector<32x16xf32>, vector<32x16xf32> -> vector<32x16xf32>
    %c1_34 = arith.constant 1 : index
    %c0_35 = arith.constant 0 : index
    %c0_36 = arith.constant 0 : index
    %30 = vector.load %arg8[%c1_34, %c0_35, %c0_36] : memref<2x1x16xf32, #tpu.memory_space<vmem>>, vector<1x1x16xf32>
    %31 = vector.shape_cast %30 : vector<1x1x16xf32> to vector<1x16xf32>
    %32 = vector.broadcast %31 : vector<1x16xf32> to vector<32x16xf32>
    %33 = arith.addf %29, %32 : vector<32x16xf32>
    %c0_37 = arith.constant 0 : index
    %c0_38 = arith.constant 0 : index
    %34 = vector.load %arg3[%c0_37, %c0_38] : memref<32x32xf32, #tpu.memory_space<vmem>>, vector<32x32xf32>
    %c0_39 = arith.constant 0 : index
    %c0_40 = arith.constant 0 : index
    %c0_41 = arith.constant 0 : index
    %35 = vector.load %arg6[%c0_39, %c0_40, %c0_41] : memref<2x32x16xf32, #tpu.memory_space<vmem>>, vector<1x32x16xf32>
    %36 = vector.shape_cast %35 : vector<1x32x16xf32> to vector<32x16xf32>
    %cst_42 = arith.constant dense<0.000000e+00> : vector<32x16xf32>
    %37 = tpu.matmul %34, %36, %cst_42 {dimension_numbers = #tpu.dot_dimension_numbers<[1], [0], [0], [1], [0, 0, 1, 1], [], []>} : vector<32x32xf32>, vector<32x16xf32>, vector<32x16xf32> -> vector<32x16xf32>
    %c0_43 = arith.constant 0 : index
    %c0_44 = arith.constant 0 : index
    %c0_45 = arith.constant 0 : index
    %38 = vector.load %arg9[%c0_43, %c0_44, %c0_45] : memref<2x1x16xf32, #tpu.memory_space<vmem>>, vector<1x1x16xf32>
    %39 = vector.shape_cast %38 : vector<1x1x16xf32> to vector<1x16xf32>
    %40 = vector.broadcast %39 : vector<1x16xf32> to vector<32x16xf32>
    %41 = arith.addf %37, %40 : vector<32x16xf32>
    %c0_46 = arith.constant 0 : index
    %c0_47 = arith.constant 0 : index
    %42 = vector.load %arg3[%c0_46, %c0_47] : memref<32x32xf32, #tpu.memory_space<vmem>>, vector<32x32xf32>
    %c1_48 = arith.constant 1 : index
    %c0_49 = arith.constant 0 : index
    %c0_50 = arith.constant 0 : index
    %43 = vector.load %arg6[%c1_48, %c0_49, %c0_50] : memref<2x32x16xf32, #tpu.memory_space<vmem>>, vector<1x32x16xf32>
    %44 = vector.shape_cast %43 : vector<1x32x16xf32> to vector<32x16xf32>
    %cst_51 = arith.constant dense<0.000000e+00> : vector<32x16xf32>
    %45 = tpu.matmul %42, %44, %cst_51 {dimension_numbers = #tpu.dot_dimension_numbers<[1], [0], [0], [1], [0, 0, 1, 1], [], []>} : vector<32x32xf32>, vector<32x16xf32>, vector<32x16xf32> -> vector<32x16xf32>
    %c1_52 = arith.constant 1 : index
    %c0_53 = arith.constant 0 : index
    %c0_54 = arith.constant 0 : index
    %46 = vector.load %arg9[%c1_52, %c0_53, %c0_54] : memref<2x1x16xf32, #tpu.memory_space<vmem>>, vector<1x1x16xf32>
    %47 = vector.shape_cast %46 : vector<1x1x16xf32> to vector<1x16xf32>
    %48 = vector.broadcast %47 : vector<1x16xf32> to vector<32x16xf32>
    %49 = arith.addf %45, %48 : vector<32x16xf32>
    %cst_55 = arith.constant 0.000000e+00 : f32
    %50 = vector.broadcast %cst_55 : f32 to vector<32x16xf32>
    %51 = vector.extract_strided_slice %9 {offsets = [0, 0], sizes = [8, 16], strides = [1, 1]} : vector<32x16xf32> to vector<8x16xf32>
    %52 = vector.extract_strided_slice %25 {offsets = [0, 0], sizes = [8, 16], strides = [1, 1]} : vector<32x16xf32> to vector<8x16xf32>
    %53 = vector.extract_strided_slice %41 {offsets = [0, 0], sizes = [8, 16], strides = [1, 1]} : vector<32x16xf32> to vector<8x16xf32>
    %54 = tpu.transpose %51, [1, 0] : vector<8x16xf32> -> vector<16x8xf32>
    %cst_56 = arith.constant dense<0.000000e+00> : vector<16x16xf32>
    %55 = tpu.matmul %54, %52, %cst_56 {dimension_numbers = #tpu.dot_dimension_numbers<[1], [0], [0], [1], [0, 0, 1, 1], [], []>} : vector<16x8xf32>, vector<8x16xf32>, vector<16x16xf32> -> vector<16x16xf32>
    %56 = arith.addf %55, %0 : vector<16x16xf32>
    %cst_57 = arith.constant dense<0xFF800000> : vector<16xf32>
    %57 = vector.multi_reduction <maximumf>, %56, %cst_57 [1] : vector<16x16xf32> to vector<16xf32>
    %58 = vector.shape_cast %57 : vector<16xf32> to vector<16x1xf32>
    %59 = vector.broadcast %58 : vector<16x1xf32> to vector<16x16xf32>
    %60 = arith.subf %56, %59 : vector<16x16xf32>
    %61 = math.exp %60 : vector<16x16xf32>
    %62 = arith.mulf %61, %1 : vector<16x16xf32>
    %cst_58 = arith.constant dense<0.000000e+00> : vector<16xf32>
    %63 = vector.multi_reduction <add>, %62, %cst_58 [1] : vector<16x16xf32> to vector<16xf32>
    %64 = vector.shape_cast %63 : vector<16xf32> to vector<16x1xf32>
    %cst_59 = arith.constant 0.000000e+00 : f32
    %65 = vector.broadcast %cst_59 : f32 to vector<16x1xf32>
    %66 = arith.cmpf ogt, %64, %65 : vector<16x1xf32>
    %cst_60 = arith.constant 1.000000e+00 : f32
    %67 = vector.broadcast %cst_60 : f32 to vector<16x1xf32>
    %68 = arith.select %66, %64, %67 : vector<16x1xi1>, vector<16x1xf32>
    %69 = tpu.reciprocal %68 {approx = true} : vector<16x1xf32> -> vector<16x1xf32>
    %70 = vector.broadcast %69 : vector<16x1xf32> to vector<16x16xf32>
    %71 = arith.mulf %62, %70 : vector<16x16xf32>
    %72 = tpu.transpose %71, [1, 0] : vector<16x16xf32> -> vector<16x16xf32>
    %cst_61 = arith.constant dense<0.000000e+00> : vector<8x16xf32>
    %73 = tpu.matmul %53, %72, %cst_61 {dimension_numbers = #tpu.dot_dimension_numbers<[1], [0], [0], [1], [0, 0, 1, 1], [], []>} : vector<8x16xf32>, vector<16x16xf32>, vector<8x16xf32> -> vector<8x16xf32>
    %c0_62 = arith.constant 0 : index
    %c0_63 = arith.constant 0 : index
    %c0_64 = arith.constant 0 : index
    %74 = vector.load %arg10[%c0_62, %c0_63, %c0_64] : memref<4x32x8xf32, #tpu.memory_space<vmem>>, vector<1x32x8xf32>
    %75 = vector.shape_cast %74 : vector<1x32x8xf32> to vector<32x8xf32>
    %cst_65 = arith.constant dense<0.000000e+00> : vector<32x16xf32>
    %76 = tpu.matmul %75, %73, %cst_65 {dimension_numbers = #tpu.dot_dimension_numbers<[1], [0], [0], [1], [0, 0, 1, 1], [], []>} : vector<32x8xf32>, vector<8x16xf32>, vector<32x16xf32> -> vector<32x16xf32>
    %77 = arith.addf %50, %76 : vector<32x16xf32>
    %78 = vector.extract_strided_slice %9 {offsets = [8, 0], sizes = [8, 16], strides = [1, 1]} : vector<32x16xf32> to vector<8x16xf32>
    %79 = vector.extract_strided_slice %25 {offsets = [8, 0], sizes = [8, 16], strides = [1, 1]} : vector<32x16xf32> to vector<8x16xf32>
    %80 = vector.extract_strided_slice %41 {offsets = [8, 0], sizes = [8, 16], strides = [1, 1]} : vector<32x16xf32> to vector<8x16xf32>
    %81 = tpu.transpose %78, [1, 0] : vector<8x16xf32> -> vector<16x8xf32>
    %cst_66 = arith.constant dense<0.000000e+00> : vector<16x16xf32>
    %82 = tpu.matmul %81, %79, %cst_66 {dimension_numbers = #tpu.dot_dimension_numbers<[1], [0], [0], [1], [0, 0, 1, 1], [], []>} : vector<16x8xf32>, vector<8x16xf32>, vector<16x16xf32> -> vector<16x16xf32>
    %83 = arith.addf %82, %0 : vector<16x16xf32>
    %cst_67 = arith.constant dense<0xFF800000> : vector<16xf32>
    %84 = vector.multi_reduction <maximumf>, %83, %cst_67 [1] : vector<16x16xf32> to vector<16xf32>
    %85 = vector.shape_cast %84 : vector<16xf32> to vector<16x1xf32>
    %86 = vector.broadcast %85 : vector<16x1xf32> to vector<16x16xf32>
    %87 = arith.subf %83, %86 : vector<16x16xf32>
    %88 = math.exp %87 : vector<16x16xf32>
    %89 = arith.mulf %88, %1 : vector<16x16xf32>
    %cst_68 = arith.constant dense<0.000000e+00> : vector<16xf32>
    %90 = vector.multi_reduction <add>, %89, %cst_68 [1] : vector<16x16xf32> to vector<16xf32>
    %91 = vector.shape_cast %90 : vector<16xf32> to vector<16x1xf32>
    %cst_69 = arith.constant 0.000000e+00 : f32
    %92 = vector.broadcast %cst_69 : f32 to vector<16x1xf32>
    %93 = arith.cmpf ogt, %91, %92 : vector<16x1xf32>
    %cst_70 = arith.constant 1.000000e+00 : f32
    %94 = vector.broadcast %cst_70 : f32 to vector<16x1xf32>
    %95 = arith.select %93, %91, %94 : vector<16x1xi1>, vector<16x1xf32>
    %96 = tpu.reciprocal %95 {approx = true} : vector<16x1xf32> -> vector<16x1xf32>
    %97 = vector.broadcast %96 : vector<16x1xf32> to vector<16x16xf32>
    %98 = arith.mulf %89, %97 : vector<16x16xf32>
    %99 = tpu.transpose %98, [1, 0] : vector<16x16xf32> -> vector<16x16xf32>
    %cst_71 = arith.constant dense<0.000000e+00> : vector<8x16xf32>
    %100 = tpu.matmul %80, %99, %cst_71 {dimension_numbers = #tpu.dot_dimension_numbers<[1], [0], [0], [1], [0, 0, 1, 1], [], []>} : vector<8x16xf32>, vector<16x16xf32>, vector<8x16xf32> -> vector<8x16xf32>
    %c1_72 = arith.constant 1 : index
    %c0_73 = arith.constant 0 : index
    %c0_74 = arith.constant 0 : index
    %101 = vector.load %arg10[%c1_72, %c0_73, %c0_74] : memref<4x32x8xf32, #tpu.memory_space<vmem>>, vector<1x32x8xf32>
    %102 = vector.shape_cast %101 : vector<1x32x8xf32> to vector<32x8xf32>
    %cst_75 = arith.constant dense<0.000000e+00> : vector<32x16xf32>
    %103 = tpu.matmul %102, %100, %cst_75 {dimension_numbers = #tpu.dot_dimension_numbers<[1], [0], [0], [1], [0, 0, 1, 1], [], []>} : vector<32x8xf32>, vector<8x16xf32>, vector<32x16xf32> -> vector<32x16xf32>
    %104 = arith.addf %77, %103 : vector<32x16xf32>
    %105 = vector.extract_strided_slice %17 {offsets = [0, 0], sizes = [8, 16], strides = [1, 1]} : vector<32x16xf32> to vector<8x16xf32>
    %106 = vector.extract_strided_slice %33 {offsets = [0, 0], sizes = [8, 16], strides = [1, 1]} : vector<32x16xf32> to vector<8x16xf32>
    %107 = vector.extract_strided_slice %49 {offsets = [0, 0], sizes = [8, 16], strides = [1, 1]} : vector<32x16xf32> to vector<8x16xf32>
    %108 = tpu.transpose %105, [1, 0] : vector<8x16xf32> -> vector<16x8xf32>
    %cst_76 = arith.constant dense<0.000000e+00> : vector<16x16xf32>
    %109 = tpu.matmul %108, %106, %cst_76 {dimension_numbers = #tpu.dot_dimension_numbers<[1], [0], [0], [1], [0, 0, 1, 1], [], []>} : vector<16x8xf32>, vector<8x16xf32>, vector<16x16xf32> -> vector<16x16xf32>
    %110 = arith.addf %109, %0 : vector<16x16xf32>
    %cst_77 = arith.constant dense<0xFF800000> : vector<16xf32>
    %111 = vector.multi_reduction <maximumf>, %110, %cst_77 [1] : vector<16x16xf32> to vector<16xf32>
    %112 = vector.shape_cast %111 : vector<16xf32> to vector<16x1xf32>
    %113 = vector.broadcast %112 : vector<16x1xf32> to vector<16x16xf32>
    %114 = arith.subf %110, %113 : vector<16x16xf32>
    %115 = math.exp %114 : vector<16x16xf32>
    %116 = arith.mulf %115, %1 : vector<16x16xf32>
    %cst_78 = arith.constant dense<0.000000e+00> : vector<16xf32>
    %117 = vector.multi_reduction <add>, %116, %cst_78 [1] : vector<16x16xf32> to vector<16xf32>
    %118 = vector.shape_cast %117 : vector<16xf32> to vector<16x1xf32>
    %cst_79 = arith.constant 0.000000e+00 : f32
    %119 = vector.broadcast %cst_79 : f32 to vector<16x1xf32>
    %120 = arith.cmpf ogt, %118, %119 : vector<16x1xf32>
    %cst_80 = arith.constant 1.000000e+00 : f32
    %121 = vector.broadcast %cst_80 : f32 to vector<16x1xf32>
    %122 = arith.select %120, %118, %121 : vector<16x1xi1>, vector<16x1xf32>
    %123 = tpu.reciprocal %122 {approx = true} : vector<16x1xf32> -> vector<16x1xf32>
    %124 = vector.broadcast %123 : vector<16x1xf32> to vector<16x16xf32>
    %125 = arith.mulf %116, %124 : vector<16x16xf32>
    %126 = tpu.transpose %125, [1, 0] : vector<16x16xf32> -> vector<16x16xf32>
    %cst_81 = arith.constant dense<0.000000e+00> : vector<8x16xf32>
    %127 = tpu.matmul %107, %126, %cst_81 {dimension_numbers = #tpu.dot_dimension_numbers<[1], [0], [0], [1], [0, 0, 1, 1], [], []>} : vector<8x16xf32>, vector<16x16xf32>, vector<8x16xf32> -> vector<8x16xf32>
    %c2 = arith.constant 2 : index
    %c0_82 = arith.constant 0 : index
    %c0_83 = arith.constant 0 : index
    %128 = vector.load %arg10[%c2, %c0_82, %c0_83] : memref<4x32x8xf32, #tpu.memory_space<vmem>>, vector<1x32x8xf32>
    %129 = vector.shape_cast %128 : vector<1x32x8xf32> to vector<32x8xf32>
    %cst_84 = arith.constant dense<0.000000e+00> : vector<32x16xf32>
    %130 = tpu.matmul %129, %127, %cst_84 {dimension_numbers = #tpu.dot_dimension_numbers<[1], [0], [0], [1], [0, 0, 1, 1], [], []>} : vector<32x8xf32>, vector<8x16xf32>, vector<32x16xf32> -> vector<32x16xf32>
    %131 = arith.addf %104, %130 : vector<32x16xf32>
    %132 = vector.extract_strided_slice %17 {offsets = [8, 0], sizes = [8, 16], strides = [1, 1]} : vector<32x16xf32> to vector<8x16xf32>
    %133 = vector.extract_strided_slice %33 {offsets = [8, 0], sizes = [8, 16], strides = [1, 1]} : vector<32x16xf32> to vector<8x16xf32>
    %134 = vector.extract_strided_slice %49 {offsets = [8, 0], sizes = [8, 16], strides = [1, 1]} : vector<32x16xf32> to vector<8x16xf32>
    %135 = tpu.transpose %132, [1, 0] : vector<8x16xf32> -> vector<16x8xf32>
    %cst_85 = arith.constant dense<0.000000e+00> : vector<16x16xf32>
    %136 = tpu.matmul %135, %133, %cst_85 {dimension_numbers = #tpu.dot_dimension_numbers<[1], [0], [0], [1], [0, 0, 1, 1], [], []>} : vector<16x8xf32>, vector<8x16xf32>, vector<16x16xf32> -> vector<16x16xf32>
    %137 = arith.addf %136, %0 : vector<16x16xf32>
    %cst_86 = arith.constant dense<0xFF800000> : vector<16xf32>
    %138 = vector.multi_reduction <maximumf>, %137, %cst_86 [1] : vector<16x16xf32> to vector<16xf32>
    %139 = vector.shape_cast %138 : vector<16xf32> to vector<16x1xf32>
    %140 = vector.broadcast %139 : vector<16x1xf32> to vector<16x16xf32>
    %141 = arith.subf %137, %140 : vector<16x16xf32>
    %142 = math.exp %141 : vector<16x16xf32>
    %143 = arith.mulf %142, %1 : vector<16x16xf32>
    %cst_87 = arith.constant dense<0.000000e+00> : vector<16xf32>
    %144 = vector.multi_reduction <add>, %143, %cst_87 [1] : vector<16x16xf32> to vector<16xf32>
    %145 = vector.shape_cast %144 : vector<16xf32> to vector<16x1xf32>
    %cst_88 = arith.constant 0.000000e+00 : f32
    %146 = vector.broadcast %cst_88 : f32 to vector<16x1xf32>
    %147 = arith.cmpf ogt, %145, %146 : vector<16x1xf32>
    %cst_89 = arith.constant 1.000000e+00 : f32
    %148 = vector.broadcast %cst_89 : f32 to vector<16x1xf32>
    %149 = arith.select %147, %145, %148 : vector<16x1xi1>, vector<16x1xf32>
    %150 = tpu.reciprocal %149 {approx = true} : vector<16x1xf32> -> vector<16x1xf32>
    %151 = vector.broadcast %150 : vector<16x1xf32> to vector<16x16xf32>
    %152 = arith.mulf %143, %151 : vector<16x16xf32>
    %153 = tpu.transpose %152, [1, 0] : vector<16x16xf32> -> vector<16x16xf32>
    %cst_90 = arith.constant dense<0.000000e+00> : vector<8x16xf32>
    %154 = tpu.matmul %134, %153, %cst_90 {dimension_numbers = #tpu.dot_dimension_numbers<[1], [0], [0], [1], [0, 0, 1, 1], [], []>} : vector<8x16xf32>, vector<16x16xf32>, vector<8x16xf32> -> vector<8x16xf32>
    %c3 = arith.constant 3 : index
    %c0_91 = arith.constant 0 : index
    %c0_92 = arith.constant 0 : index
    %155 = vector.load %arg10[%c3, %c0_91, %c0_92] : memref<4x32x8xf32, #tpu.memory_space<vmem>>, vector<1x32x8xf32>
    %156 = vector.shape_cast %155 : vector<1x32x8xf32> to vector<32x8xf32>
    %cst_93 = arith.constant dense<0.000000e+00> : vector<32x16xf32>
    %157 = tpu.matmul %156, %154, %cst_93 {dimension_numbers = #tpu.dot_dimension_numbers<[1], [0], [0], [1], [0, 0, 1, 1], [], []>} : vector<32x8xf32>, vector<8x16xf32>, vector<32x16xf32> -> vector<32x16xf32>
    %158 = arith.addf %131, %157 : vector<32x16xf32>
    %c0_94 = arith.constant 0 : index
    %c0_95 = arith.constant 0 : index
    %159 = vector.load %arg11[%c0_94, %c0_95] : memref<32x1xf32, #tpu.memory_space<vmem>>, vector<32x1xf32>
    %160 = vector.broadcast %159 : vector<32x1xf32> to vector<32x16xf32>
    %161 = arith.addf %158, %160 : vector<32x16xf32>
    %c0_96 = arith.constant 0 : index
    %c0_97 = arith.constant 0 : index
    %c0_98 = arith.constant 0 : index
    %162 = vector.load %arg14[%c0_96, %c0_97, %c0_98] : memref<2x32x16xf32, #tpu.memory_space<vmem>>, vector<1x32x16xf32>
    %163 = vector.shape_cast %162 : vector<1x32x16xf32> to vector<32x16xf32>
    %164 = vector.shape_cast %161 : vector<32x16xf32> to vector<1x32x16xf32>
    tpu.vector_store %arg14[%c0_96, %c0_97, %c0_98], %164 {strides = array<i32>} : memref<2x32x16xf32, #tpu.memory_space<vmem>>, vector<1x32x16xf32>,
    %cst_99 = arith.constant 0.000000e+00 : f32
    %165 = vector.broadcast %cst_99 : f32 to vector<32x16xf32>
    %166 = vector.extract_strided_slice %9 {offsets = [16, 0], sizes = [8, 16], strides = [1, 1]} : vector<32x16xf32> to vector<8x16xf32>
    %167 = vector.extract_strided_slice %25 {offsets = [16, 0], sizes = [8, 16], strides = [1, 1]} : vector<32x16xf32> to vector<8x16xf32>
    %168 = vector.extract_strided_slice %41 {offsets = [16, 0], sizes = [8, 16], strides = [1, 1]} : vector<32x16xf32> to vector<8x16xf32>
    %169 = tpu.transpose %166, [1, 0] : vector<8x16xf32> -> vector<16x8xf32>
    %cst_100 = arith.constant dense<0.000000e+00> : vector<16x16xf32>
    %170 = tpu.matmul %169, %167, %cst_100 {dimension_numbers = #tpu.dot_dimension_numbers<[1], [0], [0], [1], [0, 0, 1, 1], [], []>} : vector<16x8xf32>, vector<8x16xf32>, vector<16x16xf32> -> vector<16x16xf32>
    %171 = arith.addf %170, %0 : vector<16x16xf32>
    %cst_101 = arith.constant dense<0xFF800000> : vector<16xf32>
    %172 = vector.multi_reduction <maximumf>, %171, %cst_101 [1] : vector<16x16xf32> to vector<16xf32>
    %173 = vector.shape_cast %172 : vector<16xf32> to vector<16x1xf32>
    %174 = vector.broadcast %173 : vector<16x1xf32> to vector<16x16xf32>
    %175 = arith.subf %171, %174 : vector<16x16xf32>
    %176 = math.exp %175 : vector<16x16xf32>
    %177 = arith.mulf %176, %1 : vector<16x16xf32>
    %cst_102 = arith.constant dense<0.000000e+00> : vector<16xf32>
    %178 = vector.multi_reduction <add>, %177, %cst_102 [1] : vector<16x16xf32> to vector<16xf32>
    %179 = vector.shape_cast %178 : vector<16xf32> to vector<16x1xf32>
    %cst_103 = arith.constant 0.000000e+00 : f32
    %180 = vector.broadcast %cst_103 : f32 to vector<16x1xf32>
    %181 = arith.cmpf ogt, %179, %180 : vector<16x1xf32>
    %cst_104 = arith.constant 1.000000e+00 : f32
    %182 = vector.broadcast %cst_104 : f32 to vector<16x1xf32>
    %183 = arith.select %181, %179, %182 : vector<16x1xi1>, vector<16x1xf32>
    %184 = tpu.reciprocal %183 {approx = true} : vector<16x1xf32> -> vector<16x1xf32>
    %185 = vector.broadcast %184 : vector<16x1xf32> to vector<16x16xf32>
    %186 = arith.mulf %177, %185 : vector<16x16xf32>
    %187 = tpu.transpose %186, [1, 0] : vector<16x16xf32> -> vector<16x16xf32>
    %cst_105 = arith.constant dense<0.000000e+00> : vector<8x16xf32>
    %188 = tpu.matmul %168, %187, %cst_105 {dimension_numbers = #tpu.dot_dimension_numbers<[1], [0], [0], [1], [0, 0, 1, 1], [], []>} : vector<8x16xf32>, vector<16x16xf32>, vector<8x16xf32> -> vector<8x16xf32>
    %c0_106 = arith.constant 0 : index
    %c0_107 = arith.constant 0 : index
    %c0_108 = arith.constant 0 : index
    %189 = vector.load %arg10[%c0_106, %c0_107, %c0_108] : memref<4x32x8xf32, #tpu.memory_space<vmem>>, vector<1x32x8xf32>
    %190 = vector.shape_cast %189 : vector<1x32x8xf32> to vector<32x8xf32>
    %cst_109 = arith.constant dense<0.000000e+00> : vector<32x16xf32>
    %191 = tpu.matmul %190, %188, %cst_109 {dimension_numbers = #tpu.dot_dimension_numbers<[1], [0], [0], [1], [0, 0, 1, 1], [], []>} : vector<32x8xf32>, vector<8x16xf32>, vector<32x16xf32> -> vector<32x16xf32>
    %192 = arith.addf %165, %191 : vector<32x16xf32>
    %193 = vector.extract_strided_slice %9 {offsets = [24, 0], sizes = [8, 16], strides = [1, 1]} : vector<32x16xf32> to vector<8x16xf32>
    %194 = vector.extract_strided_slice %25 {offsets = [24, 0], sizes = [8, 16], strides = [1, 1]} : vector<32x16xf32> to vector<8x16xf32>
    %195 = vector.extract_strided_slice %41 {offsets = [24, 0], sizes = [8, 16], strides = [1, 1]} : vector<32x16xf32> to vector<8x16xf32>
    %196 = tpu.transpose %193, [1, 0] : vector<8x16xf32> -> vector<16x8xf32>
    %cst_110 = arith.constant dense<0.000000e+00> : vector<16x16xf32>
    %197 = tpu.matmul %196, %194, %cst_110 {dimension_numbers = #tpu.dot_dimension_numbers<[1], [0], [0], [1], [0, 0, 1, 1], [], []>} : vector<16x8xf32>, vector<8x16xf32>, vector<16x16xf32> -> vector<16x16xf32>
    %198 = arith.addf %197, %0 : vector<16x16xf32>
    %cst_111 = arith.constant dense<0xFF800000> : vector<16xf32>
    %199 = vector.multi_reduction <maximumf>, %198, %cst_111 [1] : vector<16x16xf32> to vector<16xf32>
    %200 = vector.shape_cast %199 : vector<16xf32> to vector<16x1xf32>
    %201 = vector.broadcast %200 : vector<16x1xf32> to vector<16x16xf32>
    %202 = arith.subf %198, %201 : vector<16x16xf32>
    %203 = math.exp %202 : vector<16x16xf32>
    %204 = arith.mulf %203, %1 : vector<16x16xf32>
    %cst_112 = arith.constant dense<0.000000e+00> : vector<16xf32>
    %205 = vector.multi_reduction <add>, %204, %cst_112 [1] : vector<16x16xf32> to vector<16xf32>
    %206 = vector.shape_cast %205 : vector<16xf32> to vector<16x1xf32>
    %cst_113 = arith.constant 0.000000e+00 : f32
    %207 = vector.broadcast %cst_113 : f32 to vector<16x1xf32>
    %208 = arith.cmpf ogt, %206, %207 : vector<16x1xf32>
    %cst_114 = arith.constant 1.000000e+00 : f32
    %209 = vector.broadcast %cst_114 : f32 to vector<16x1xf32>
    %210 = arith.select %208, %206, %209 : vector<16x1xi1>, vector<16x1xf32>
    %211 = tpu.reciprocal %210 {approx = true} : vector<16x1xf32> -> vector<16x1xf32>
    %212 = vector.broadcast %211 : vector<16x1xf32> to vector<16x16xf32>
    %213 = arith.mulf %204, %212 : vector<16x16xf32>
    %214 = tpu.transpose %213, [1, 0] : vector<16x16xf32> -> vector<16x16xf32>
    %cst_115 = arith.constant dense<0.000000e+00> : vector<8x16xf32>
    %215 = tpu.matmul %195, %214, %cst_115 {dimension_numbers = #tpu.dot_dimension_numbers<[1], [0], [0], [1], [0, 0, 1, 1], [], []>} : vector<8x16xf32>, vector<16x16xf32>, vector<8x16xf32> -> vector<8x16xf32>
    %c1_116 = arith.constant 1 : index
    %c0_117 = arith.constant 0 : index
    %c0_118 = arith.constant 0 : index
    %216 = vector.load %arg10[%c1_116, %c0_117, %c0_118] : memref<4x32x8xf32, #tpu.memory_space<vmem>>, vector<1x32x8xf32>
    %217 = vector.shape_cast %216 : vector<1x32x8xf32> to vector<32x8xf32>
    %cst_119 = arith.constant dense<0.000000e+00> : vector<32x16xf32>
    %218 = tpu.matmul %217, %215, %cst_119 {dimension_numbers = #tpu.dot_dimension_numbers<[1], [0], [0], [1], [0, 0, 1, 1], [], []>} : vector<32x8xf32>, vector<8x16xf32>, vector<32x16xf32> -> vector<32x16xf32>
    %219 = arith.addf %192, %218 : vector<32x16xf32>
    %220 = vector.extract_strided_slice %17 {offsets = [16, 0], sizes = [8, 16], strides = [1, 1]} : vector<32x16xf32> to vector<8x16xf32>
    %221 = vector.extract_strided_slice %33 {offsets = [16, 0], sizes = [8, 16], strides = [1, 1]} : vector<32x16xf32> to vector<8x16xf32>
    %222 = vector.extract_strided_slice %49 {offsets = [16, 0], sizes = [8, 16], strides = [1, 1]} : vector<32x16xf32> to vector<8x16xf32>
    %223 = tpu.transpose %220, [1, 0] : vector<8x16xf32> -> vector<16x8xf32>
    %cst_120 = arith.constant dense<0.000000e+00> : vector<16x16xf32>
    %224 = tpu.matmul %223, %221, %cst_120 {dimension_numbers = #tpu.dot_dimension_numbers<[1], [0], [0], [1], [0, 0, 1, 1], [], []>} : vector<16x8xf32>, vector<8x16xf32>, vector<16x16xf32> -> vector<16x16xf32>
    %225 = arith.addf %224, %0 : vector<16x16xf32>
    %cst_121 = arith.constant dense<0xFF800000> : vector<16xf32>
    %226 = vector.multi_reduction <maximumf>, %225, %cst_121 [1] : vector<16x16xf32> to vector<16xf32>
    %227 = vector.shape_cast %226 : vector<16xf32> to vector<16x1xf32>
    %228 = vector.broadcast %227 : vector<16x1xf32> to vector<16x16xf32>
    %229 = arith.subf %225, %228 : vector<16x16xf32>
    %230 = math.exp %229 : vector<16x16xf32>
    %231 = arith.mulf %230, %1 : vector<16x16xf32>
    %cst_122 = arith.constant dense<0.000000e+00> : vector<16xf32>
    %232 = vector.multi_reduction <add>, %231, %cst_122 [1] : vector<16x16xf32> to vector<16xf32>
    %233 = vector.shape_cast %232 : vector<16xf32> to vector<16x1xf32>
    %cst_123 = arith.constant 0.000000e+00 : f32
    %234 = vector.broadcast %cst_123 : f32 to vector<16x1xf32>
    %235 = arith.cmpf ogt, %233, %234 : vector<16x1xf32>
    %cst_124 = arith.constant 1.000000e+00 : f32
    %236 = vector.broadcast %cst_124 : f32 to vector<16x1xf32>
    %237 = arith.select %235, %233, %236 : vector<16x1xi1>, vector<16x1xf32>
    %238 = tpu.reciprocal %237 {approx = true} : vector<16x1xf32> -> vector<16x1xf32>
    %239 = vector.broadcast %238 : vector<16x1xf32> to vector<16x16xf32>
    %240 = arith.mulf %231, %239 : vector<16x16xf32>
    %241 = tpu.transpose %240, [1, 0] : vector<16x16xf32> -> vector<16x16xf32>
    %cst_125 = arith.constant dense<0.000000e+00> : vector<8x16xf32>
    %242 = tpu.matmul %222, %241, %cst_125 {dimension_numbers = #tpu.dot_dimension_numbers<[1], [0], [0], [1], [0, 0, 1, 1], [], []>} : vector<8x16xf32>, vector<16x16xf32>, vector<8x16xf32> -> vector<8x16xf32>
    %c2_126 = arith.constant 2 : index
    %c0_127 = arith.constant 0 : index
    %c0_128 = arith.constant 0 : index
    %243 = vector.load %arg10[%c2_126, %c0_127, %c0_128] : memref<4x32x8xf32, #tpu.memory_space<vmem>>, vector<1x32x8xf32>
    %244 = vector.shape_cast %243 : vector<1x32x8xf32> to vector<32x8xf32>
    %cst_129 = arith.constant dense<0.000000e+00> : vector<32x16xf32>
    %245 = tpu.matmul %244, %242, %cst_129 {dimension_numbers = #tpu.dot_dimension_numbers<[1], [0], [0], [1], [0, 0, 1, 1], [], []>} : vector<32x8xf32>, vector<8x16xf32>, vector<32x16xf32> -> vector<32x16xf32>
    %246 = arith.addf %219, %245 : vector<32x16xf32>
    %247 = vector.extract_strided_slice %17 {offsets = [24, 0], sizes = [8, 16], strides = [1, 1]} : vector<32x16xf32> to vector<8x16xf32>
    %248 = vector.extract_strided_slice %33 {offsets = [24, 0], sizes = [8, 16], strides = [1, 1]} : vector<32x16xf32> to vector<8x16xf32>
    %249 = vector.extract_strided_slice %49 {offsets = [24, 0], sizes = [8, 16], strides = [1, 1]} : vector<32x16xf32> to vector<8x16xf32>
    %250 = tpu.transpose %247, [1, 0] : vector<8x16xf32> -> vector<16x8xf32>
    %cst_130 = arith.constant dense<0.000000e+00> : vector<16x16xf32>
    %251 = tpu.matmul %250, %248, %cst_130 {dimension_numbers = #tpu.dot_dimension_numbers<[1], [0], [0], [1], [0, 0, 1, 1], [], []>} : vector<16x8xf32>, vector<8x16xf32>, vector<16x16xf32> -> vector<16x16xf32>
    %252 = arith.addf %251, %0 : vector<16x16xf32>
    %cst_131 = arith.constant dense<0xFF800000> : vector<16xf32>
    %253 = vector.multi_reduction <maximumf>, %252, %cst_131 [1] : vector<16x16xf32> to vector<16xf32>
    %254 = vector.shape_cast %253 : vector<16xf32> to vector<16x1xf32>
    %255 = vector.broadcast %254 : vector<16x1xf32> to vector<16x16xf32>
    %256 = arith.subf %252, %255 : vector<16x16xf32>
    %257 = math.exp %256 : vector<16x16xf32>
    %258 = arith.mulf %257, %1 : vector<16x16xf32>
    %cst_132 = arith.constant dense<0.000000e+00> : vector<16xf32>
    %259 = vector.multi_reduction <add>, %258, %cst_132 [1] : vector<16x16xf32> to vector<16xf32>
    %260 = vector.shape_cast %259 : vector<16xf32> to vector<16x1xf32>
    %cst_133 = arith.constant 0.000000e+00 : f32
    %261 = vector.broadcast %cst_133 : f32 to vector<16x1xf32>
    %262 = arith.cmpf ogt, %260, %261 : vector<16x1xf32>
    %cst_134 = arith.constant 1.000000e+00 : f32
    %263 = vector.broadcast %cst_134 : f32 to vector<16x1xf32>
    %264 = arith.select %262, %260, %263 : vector<16x1xi1>, vector<16x1xf32>
    %265 = tpu.reciprocal %264 {approx = true} : vector<16x1xf32> -> vector<16x1xf32>
    %266 = vector.broadcast %265 : vector<16x1xf32> to vector<16x16xf32>
    %267 = arith.mulf %258, %266 : vector<16x16xf32>
    %268 = tpu.transpose %267, [1, 0] : vector<16x16xf32> -> vector<16x16xf32>
    %cst_135 = arith.constant dense<0.000000e+00> : vector<8x16xf32>
    %269 = tpu.matmul %249, %268, %cst_135 {dimension_numbers = #tpu.dot_dimension_numbers<[1], [0], [0], [1], [0, 0, 1, 1], [], []>} : vector<8x16xf32>, vector<16x16xf32>, vector<8x16xf32> -> vector<8x16xf32>
    %c3_136 = arith.constant 3 : index
    %c0_137 = arith.constant 0 : index
    %c0_138 = arith.constant 0 : index
    %270 = vector.load %arg10[%c3_136, %c0_137, %c0_138] : memref<4x32x8xf32, #tpu.memory_space<vmem>>, vector<1x32x8xf32>
    %271 = vector.shape_cast %270 : vector<1x32x8xf32> to vector<32x8xf32>
    %cst_139 = arith.constant dense<0.000000e+00> : vector<32x16xf32>
    %272 = tpu.matmul %271, %269, %cst_139 {dimension_numbers = #tpu.dot_dimension_numbers<[1], [0], [0], [1], [0, 0, 1, 1], [], []>} : vector<32x8xf32>, vector<8x16xf32>, vector<32x16xf32> -> vector<32x16xf32>
    %273 = arith.addf %246, %272 : vector<32x16xf32>
    %c0_140 = arith.constant 0 : index
    %c0_141 = arith.constant 0 : index
    %274 = vector.load %arg11[%c0_140, %c0_141] : memref<32x1xf32, #tpu.memory_space<vmem>>, vector<32x1xf32>
    %275 = vector.broadcast %274 : vector<32x1xf32> to vector<32x16xf32>
    %276 = arith.addf %273, %275 : vector<32x16xf32>
    %c1_142 = arith.constant 1 : index
    %c0_143 = arith.constant 0 : index
    %c0_144 = arith.constant 0 : index
    %277 = vector.load %arg14[%c1_142, %c0_143, %c0_144] : memref<2x32x16xf32, #tpu.memory_space<vmem>>, vector<1x32x16xf32>
    %278 = vector.shape_cast %277 : vector<1x32x16xf32> to vector<32x16xf32>
    %279 = vector.shape_cast %276 : vector<32x16xf32> to vector<1x32x16xf32>
    tpu.vector_store %arg14[%c1_142, %c0_143, %c0_144], %279 {strides = array<i32>} : memref<2x32x16xf32, #tpu.memory_space<vmem>>, vector<1x32x16xf32>,
    return
  }
  func.func @transform_0(%arg0: i32) -> (i32, i32) {
    %c0_i32 = arith.constant 0 : i32
    %c0_i32_0 = arith.constant 0 : i32
    %c0_i32_1 = arith.constant 0 : i32
    return %c0_i32, %c0_i32_0 : i32, i32
  }
  func.func @transform_1(%arg0: i32) -> (i32, i32) {
    %c0_i32 = arith.constant 0 : i32
    %c0_i32_0 = arith.constant 0 : i32
    %c0_i32_1 = arith.constant 0 : i32
    return %c0_i32, %c0_i32_0 : i32, i32
  }
  func.func @transform_2(%arg0: i32) -> (i32, i32) {
    %c0_i32 = arith.constant 0 : i32
    %c0_i32_0 = arith.constant 0 : i32
    %c0_i32_1 = arith.constant 0 : i32
    return %c0_i32, %c0_i32_0 : i32, i32
  }
  func.func @transform_3(%arg0: i32) -> (i32, i32, i32) {
    %c0_i32 = arith.constant 0 : i32
    %c0_i32_0 = arith.constant 0 : i32
    %c0_i32_1 = arith.constant 0 : i32
    %c0_i32_2 = arith.constant 0 : i32
    return %c0_i32, %c0_i32_0, %c0_i32_1 : i32, i32, i32
  }
  func.func @transform_4(%arg0: i32) -> (i32, i32, i32) {
    %c0_i32 = arith.constant 0 : i32
    %c0_i32_0 = arith.constant 0 : i32
    %c0_i32_1 = arith.constant 0 : i32
    %c0_i32_2 = arith.constant 0 : i32
    return %c0_i32, %c0_i32_0, %c0_i32_1 : i32, i32, i32
  }
  func.func @transform_5(%arg0: i32) -> (i32, i32, i32) {
    %c0_i32 = arith.constant 0 : i32
    %c0_i32_0 = arith.constant 0 : i32
    %c0_i32_1 = arith.constant 0 : i32
    %c0_i32_2 = arith.constant 0 : i32
    return %c0_i32, %c0_i32_0, %c0_i32_1 : i32, i32, i32
  }
  func.func @transform_6(%arg0: i32) -> (i32, i32, i32) {
    %c0_i32 = arith.constant 0 : i32
    %c0_i32_0 = arith.constant 0 : i32
    %c0_i32_1 = arith.constant 0 : i32
    %c0_i32_2 = arith.constant 0 : i32
    return %c0_i32, %c0_i32_0, %c0_i32_1 : i32, i32, i32
  }
  func.func @transform_7(%arg0: i32) -> (i32, i32, i32) {
    %c0_i32 = arith.constant 0 : i32
    %c0_i32_0 = arith.constant 0 : i32
    %c0_i32_1 = arith.constant 0 : i32
    %c0_i32_2 = arith.constant 0 : i32
    return %c0_i32, %c0_i32_0, %c0_i32_1 : i32, i32, i32
  }
  func.func @transform_8(%arg0: i32) -> (i32, i32, i32) {
    %c0_i32 = arith.constant 0 : i32
    %c0_i32_0 = arith.constant 0 : i32
    %c0_i32_1 = arith.constant 0 : i32
    %c0_i32_2 = arith.constant 0 : i32
    return %c0_i32, %c0_i32_0, %c0_i32_1 : i32, i32, i32
  }
  func.func @transform_9(%arg0: i32) -> (i32, i32, i32) {
    %c0_i32 = arith.constant 0 : i32
    %c0_i32_0 = arith.constant 0 : i32
    %c0_i32_1 = arith.constant 0 : i32
    %c0_i32_2 = arith.constant 0 : i32
    return %c0_i32, %c0_i32_0, %c0_i32_1 : i32, i32, i32
  }
  func.func @transform_10(%arg0: i32) -> (i32, i32) {
    %c0_i32 = arith.constant 0 : i32
    %c0_i32_0 = arith.constant 0 : i32
    %c0_i32_1 = arith.constant 0 : i32
    return %c0_i32, %c0_i32_0 : i32, i32
  }
  func.func @transform_11(%arg0: i32) -> (i32, i32) {
    %c0_i32 = arith.constant 0 : i32
    %c0_i32_0 = arith.constant 0 : i32
    %c0_i32_1 = arith.constant 0 : i32
    return %c0_i32, %c0_i32_0 : i32, i32
  }
  func.func @transform_12(%arg0: i32) -> (i32, i32) {
    %c0_i32 = arith.constant 0 : i32
    %c0_i32_0 = arith.constant 0 : i32
    %c0_i32_1 = arith.constant 0 : i32
    return %c0_i32, %c0_i32_0 : i32, i32
  }
  func.func @transform_13(%arg0: i32) -> (i32, i32, i32) {
    %c0_i32 = arith.constant 0 : i32
    %c0_i32_0 = arith.constant 0 : i32
    %c0_i32_1 = arith.constant 0 : i32
    %c0_i32_2 = arith.constant 0 : i32
    return %c0_i32, %c0_i32_0, %c0_i32_1 : i32, i32, i32
  }
}

</mosaic_0001>

<llo_original>
// kernel: sparse_attention_forward.1
$region0: #{sparse_attention_forward.1}
  #allocation0 [shape = 'u32[]', space=smem, size = 0x4, offset = 0x4, fixed_abs, tag = 'smem constant byte address 0x4 - core index']
  #allocation1 [shape = 'u32[72,128]{1,0:T(1,128)}', space=vmem, size = 0x9000, scoped, tag = 'internal scratch']
  %s0 = inlined_call_operand.vmem [shape: f32[32,32], index: 0, kind: input, shape index: {}]
  %s1 = inlined_call_operand.vmem [shape: f32[32,32], index: 1, kind: input, shape index: {}]
  %s2 = inlined_call_operand.vmem [shape: f32[32,32], index: 2, kind: input, shape index: {}]
  %s3 = inlined_call_operand.vmem [shape: f32[2,32,16], index: 3, kind: input, shape index: {}]
  %s4 = inlined_call_operand.vmem [shape: f32[2,32,16], index: 4, kind: input, shape index: {}]
  %s5 = inlined_call_operand.vmem [shape: f32[2,32,16], index: 5, kind: input, shape index: {}]
  %s6 = inlined_call_operand.vmem [shape: f32[2,1,16], index: 6, kind: input, shape index: {}]
  %s7 = inlined_call_operand.vmem [shape: f32[2,1,16], index: 7, kind: input, shape index: {}]
  %s8 = inlined_call_operand.vmem [shape: f32[2,1,16], index: 8, kind: input, shape index: {}]
  %s9 = inlined_call_operand.vmem [shape: f32[4,32,8], index: 9, kind: input, shape index: {}]
  %s10 = inlined_call_operand.vmem [shape: f32[32,1], index: 10, kind: input, shape index: {}]
  %s11 = inlined_call_operand.vmem [shape: f32[16,16], index: 11, kind: input, shape index: {}]
  %s12 = inlined_call_operand.vmem [shape: f32[16,16], index: 12, kind: input, shape index: {}]
  %s13 = inlined_call_operand.vmem [shape: f32[2,32,16], index: 13, kind: output, shape index: {}]
  %s14 = sld [smem:[#allocation0]]
  $region62: #{sparse_attention_forward.1} parent=0
    _
  %s16 = ssub.s32 1, %s14
  %s17 = scalar_select 0, %s16, %s14
  // Predicated region
  $region2: #{sparse_attention_forward.1} parent=0 // pred_check
    _
  $region3: #{sparse_attention_forward.1} parent=0 // pred_check_branch
    %19 = sbr.rel (0) target = $region5
  $region4: #{sparse_attention_forward.1} parent=0 // pred_region
    _
  $region5: #{sparse_attention_forward.1} parent=0 // pred_fallthru
    _
  // Predicated region
  $region6: #{sparse_attention_forward.1} parent=0 // pred_check
    _
  $region7: #{sparse_attention_forward.1} parent=0 // pred_check_branch
    %21 = sbr.rel (0) target = $region9
  $region8: #{sparse_attention_forward.1} parent=0 // pred_region
    _
  $region9: #{sparse_attention_forward.1} parent=0 // pred_fallthru
    _
  // Predicated region
  $region10: #{sparse_attention_forward.1} parent=0 // pred_check
    _
  $region11: #{sparse_attention_forward.1} parent=0 // pred_check_branch
    %23 = sbr.rel (0) target = $region13
  $region12: #{sparse_attention_forward.1} parent=0 // pred_region
    _
  $region13: #{sparse_attention_forward.1} parent=0 // pred_fallthru
    _
  // Predicated region
  $region14: #{sparse_attention_forward.1} parent=0 // pred_check
    _
  $region15: #{sparse_attention_forward.1} parent=0 // pred_check_branch
    %25 = sbr.rel (0) target = $region17
  $region16: #{sparse_attention_forward.1} parent=0 // pred_region
    _
  $region17: #{sparse_attention_forward.1} parent=0 // pred_fallthru
    _
  // Predicated region
  $region18: #{sparse_attention_forward.1} parent=0 // pred_check
    _
  $region19: #{sparse_attention_forward.1} parent=0 // pred_check_branch
    %27 = sbr.rel (0) target = $region21
  $region20: #{sparse_attention_forward.1} parent=0 // pred_region
    _
  $region21: #{sparse_attention_forward.1} parent=0 // pred_fallthru
    _
  // Predicated region
  $region22: #{sparse_attention_forward.1} parent=0 // pred_check
    _
  $region23: #{sparse_attention_forward.1} parent=0 // pred_check_branch
    %29 = sbr.rel (0) target = $region25
  $region24: #{sparse_attention_forward.1} parent=0 // pred_region
    _
  $region25: #{sparse_attention_forward.1} parent=0 // pred_fallthru
    _
  // Predicated region
  $region26: #{sparse_attention_forward.1} parent=0 // pred_check
    _
  $region27: #{sparse_attention_forward.1} parent=0 // pred_check_branch
    %31 = sbr.rel (0) target = $region29
  $region28: #{sparse_attention_forward.1} parent=0 // pred_region
    _
  $region29: #{sparse_attention_forward.1} parent=0 // pred_fallthru
    _
  // Predicated region
  $region30: #{sparse_attention_forward.1} parent=0 // pred_check
    _
  $region31: #{sparse_attention_forward.1} parent=0 // pred_check_branch
    %33 = sbr.rel (0) target = $region33
  $region32: #{sparse_attention_forward.1} parent=0 // pred_region
    _
  $region33: #{sparse_attention_forward.1} parent=0 // pred_fallthru
    _
  // Predicated region
  $region34: #{sparse_attention_forward.1} parent=0 // pred_check
    _
  $region35: #{sparse_attention_forward.1} parent=0 // pred_check_branch
    %35 = sbr.rel (0) target = $region37
  $region36: #{sparse_attention_forward.1} parent=0 // pred_region
    _
  $region37: #{sparse_attention_forward.1} parent=0 // pred_fallthru
    _
  // Predicated region
  $region38: #{sparse_attention_forward.1} parent=0 // pred_check
    _
  $region39: #{sparse_attention_forward.1} parent=0 // pred_check_branch
    %37 = sbr.rel (0) target = $region41
  $region40: #{sparse_attention_forward.1} parent=0 // pred_region
    _
  $region41: #{sparse_attention_forward.1} parent=0 // pred_fallthru
    _
  // Predicated region
  $region42: #{sparse_attention_forward.1} parent=0 // pred_check
    _
  $region43: #{sparse_attention_forward.1} parent=0 // pred_check_branch
    %39 = sbr.rel (0) target = $region45
  $region44: #{sparse_attention_forward.1} parent=0 // pred_region
    _
  $region45: #{sparse_attention_forward.1} parent=0 // pred_fallthru
    _
  // Predicated region
  $region46: #{sparse_attention_forward.1} parent=0 // pred_check
    _
  $region47: #{sparse_attention_forward.1} parent=0 // pred_check_branch
    %41 = sbr.rel (0) target = $region49
  $region48: #{sparse_attention_forward.1} parent=0 // pred_region
    _
  $region49: #{sparse_attention_forward.1} parent=0 // pred_fallthru
    _
  // Predicated region
  $region50: #{sparse_attention_forward.1} parent=0 // pred_check
    _
  $region51: #{sparse_attention_forward.1} parent=0 // pred_check_branch
    %43 = sbr.rel (0) target = $region53
  $region52: #{sparse_attention_forward.1} parent=0 // pred_region
    _
  $region53: #{sparse_attention_forward.1} parent=0 // pred_fallthru
    _
  %v44 = vld [vmem:[%s11] sm:$0xff]
  %v45 = vld [vmem:[%s11 + $0x8] sm:$0xff]
  %v46 = vld [vmem:[%s12] sm:$0xff]
  %v47 = vld [vmem:[%s12 + $0x8] sm:$0xff]
  %v48 = vld [vmem:[%s0] sm:$0xff]
  %v49 = vld [vmem:[%s0 + $0x8] sm:$0xff]
  %v50 = vld [vmem:[%s0 + $0x10] sm:$0xff]
  %v51 = vld [vmem:[%s0 + $0x18] sm:$0xff]
  %v52 = vld [vmem:[%s3] sm:$0xff]
  %v53 = vld [vmem:[%s3 + $0x8] sm:$0xff]
  %v54 = vld [vmem:[%s3 + $0x10] sm:$0xff]
  %v55 = vld [vmem:[%s3 + $0x18] sm:$0xff]
  %v56 = vld [vmem:[%s6] sm:$0x1]
  %v58 = vperm.slane %v56, 0
  %vm60 = vcmask 261120
  %v62 = vsel %vm60, %v48, 0
  %v65 = vsel %vm60, %v49, 0
  %v68 = vsel %vm60, %v50, 0
  %v71 = vsel %vm60, %v51, 0
  %73 = vmatpush.msra.mxu0 0.0
  %74 = vmatpush.msra.mxu0 0.0
  %75 = vmatpush.msra.mxu0 0.0
  %76 = vmatpush.msra.mxu0 0.0
  %77 = vmatpush.msra.mxu0 0.0
  %78 = vmatpush.msra.mxu0 0.0
  %79 = vmatpush.msra.mxu0 0.0
  %80 = vmatpush.msra.mxu0 0.0
  %81 = vmatpush.msra.mxu0 0.0
  %82 = vmatpush.msra.mxu0 0.0
  %83 = vmatpush.msra.mxu0 0.0
  %84 = vmatpush.msra.mxu0 0.0
  %85 = vmatpush.msra.mxu0 %v55
  %86 = vmatpush.msra.mxu0 %v54
  %87 = vmatpush.msra.mxu0 %v53
  %88 = vmatpush.msra.mxu0 %v52
  %89 = vmatmul.f32.gmra.mxu0 %v62
  %v90 = vpop.f32.mrf.mxu0
  %v91 = vadd.f32 %v58, %v90
  %92 = vmatmul.f32.gmra.mxu0 %v65
  %v93 = vpop.f32.mrf.mxu0
  %v94 = vadd.f32 %v58, %v93
  %95 = vmatmul.f32.gmra.mxu0 %v68
  %v96 = vpop.f32.mrf.mxu0
  %v97 = vadd.f32 %v58, %v96
  %98 = vmatmul.f32.gmra.mxu0 %v71
  %v99 = vpop.f32.mrf.mxu0
  %v100 = vadd.f32 %v58, %v99
  %101 = vdwg.mxu0
  %s102 = scalar_lea.vmem %s3, 32
  %v103 = vld [vmem:[%s102] sm:$0xff]
  %v104 = vld [vmem:[%s102 + $0x8] sm:$0xff]
  %v105 = vld [vmem:[%s102 + $0x10] sm:$0xff]
  %v106 = vld [vmem:[%s102 + $0x18] sm:$0xff]
  %s107 = scalar_lea.vmem %s6, 1
  %v108 = vld [vmem:[%s107] sm:$0x1]
  %v110 = vperm.slane %v108, 0
  %112 = vmatpush.msra.mxu0 0.0
  %113 = vmatpush.msra.mxu0 0.0
  %114 = vmatpush.msra.mxu0 0.0
  %115 = vmatpush.msra.mxu0 0.0
  %116 = vmatpush.msra.mxu0 0.0
  %117 = vmatpush.msra.mxu0 0.0
  %118 = vmatpush.msra.mxu0 0.0
  %119 = vmatpush.msra.mxu0 0.0
  %120 = vmatpush.msra.mxu0 0.0
  %121 = vmatpush.msra.mxu0 0.0
  %122 = vmatpush.msra.mxu0 0.0
  %123 = vmatpush.msra.mxu0 0.0
  %124 = vmatpush.msra.mxu0 %v106
  %125 = vmatpush.msra.mxu0 %v105
  %126 = vmatpush.msra.mxu0 %v104
  %127 = vmatpush.msra.mxu0 %v103
  %128 = vmatmul.f32.gmra.mxu0 %v62
  %v129 = vpop.f32.mrf.mxu0
  %v130 = vadd.f32 %v110, %v129
  %131 = vmatmul.f32.gmra.mxu0 %v65
  %v132 = vpop.f32.mrf.mxu0
  %v133 = vadd.f32 %v110, %v132
  %134 = vmatmul.f32.gmra.mxu0 %v68
  %v135 = vpop.f32.mrf.mxu0
  %v136 = vadd.f32 %v110, %v135
  %137 = vmatmul.f32.gmra.mxu0 %v71
  %v138 = vpop.f32.mrf.mxu0
  %v139 = vadd.f32 %v110, %v138
  %140 = vdwg.mxu0
  %v141 = vld [vmem:[%s1] sm:$0xff]
  %v142 = vld [vmem:[%s1 + $0x8] sm:$0xff]
  %v143 = vld [vmem:[%s1 + $0x10] sm:$0xff]
  %v144 = vld [vmem:[%s1 + $0x18] sm:$0xff]
  %v145 = vld [vmem:[%s4] sm:$0xff]
  %v146 = vld [vmem:[%s4 + $0x8] sm:$0xff]
  %v147 = vld [vmem:[%s4 + $0x10] sm:$0xff]
  %v148 = vld [vmem:[%s4 + $0x18] sm:$0xff]
  %v149 = vld [vmem:[%s7] sm:$0x1]
  %v151 = vperm.slane %v149, 0
  %v154 = vsel %vm60, %v141, 0
  %v157 = vsel %vm60, %v142, 0
  %v160 = vsel %vm60, %v143, 0
  %v163 = vsel %vm60, %v144, 0
  %165 = vmatpush.msra.mxu0 0.0
  %166 = vmatpush.msra.mxu0 0.0
  %167 = vmatpush.msra.mxu0 0.0
  %168 = vmatpush.msra.mxu0 0.0
  %169 = vmatpush.msra.mxu0 0.0
  %170 = vmatpush.msra.mxu0 0.0
  %171 = vmatpush.msra.mxu0 0.0
  %172 = vmatpush.msra.mxu0 0.0
  %173 = vmatpush.msra.mxu0 0.0
  %174 = vmatpush.msra.mxu0 0.0
  %175 = vmatpush.msra.mxu0 0.0
  %176 = vmatpush.msra.mxu0 0.0
  %177 = vmatpush.msra.mxu0 %v148
  %178 = vmatpush.msra.mxu0 %v147
  %179 = vmatpush.msra.mxu0 %v146
  %180 = vmatpush.msra.mxu0 %v145
  %181 = vmatmul.f32.gmra.mxu0 %v154
  %v182 = vpop.f32.mrf.mxu0
  %v183 = vadd.f32 %v151, %v182
  %184 = vmatmul.f32.gmra.mxu0 %v157
  %v185 = vpop.f32.mrf.mxu0
  %v186 = vadd.f32 %v151, %v185
  %187 = vmatmul.f32.gmra.mxu0 %v160
  %v188 = vpop.f32.mrf.mxu0
  %v189 = vadd.f32 %v151, %v188
  %190 = vmatmul.f32.gmra.mxu0 %v163
  %v191 = vpop.f32.mrf.mxu0
  %v192 = vadd.f32 %v151, %v191
  %193 = vdwg.mxu0
  %s194 = scalar_lea.vmem %s4, 32
  %v195 = vld [vmem:[%s194] sm:$0xff]
  %v196 = vld [vmem:[%s194 + $0x8] sm:$0xff]
  %v197 = vld [vmem:[%s194 + $0x10] sm:$0xff]
  %v198 = vld [vmem:[%s194 + $0x18] sm:$0xff]
  %s199 = scalar_lea.vmem %s7, 1
  %v200 = vld [vmem:[%s199] sm:$0x1]
  %v202 = vperm.slane %v200, 0
  %204 = vmatpush.msra.mxu0 0.0
  %205 = vmatpush.msra.mxu0 0.0
  %206 = vmatpush.msra.mxu0 0.0
  %207 = vmatpush.msra.mxu0 0.0
  %208 = vmatpush.msra.mxu0 0.0
  %209 = vmatpush.msra.mxu0 0.0
  %210 = vmatpush.msra.mxu0 0.0
  %211 = vmatpush.msra.mxu0 0.0
  %212 = vmatpush.msra.mxu0 0.0
  %213 = vmatpush.msra.mxu0 0.0
  %214 = vmatpush.msra.mxu0 0.0
  %215 = vmatpush.msra.mxu0 0.0
  %216 = vmatpush.msra.mxu0 %v198
  %217 = vmatpush.msra.mxu0 %v197
  %218 = vmatpush.msra.mxu0 %v196
  %219 = vmatpush.msra.mxu0 %v195
  %220 = vmatmul.f32.gmra.mxu0 %v154
  %v221 = vpop.f32.mrf.mxu0
  %v222 = vadd.f32 %v202, %v221
  %223 = vmatmul.f32.gmra.mxu0 %v157
  %v224 = vpop.f32.mrf.mxu0
  %v225 = vadd.f32 %v202, %v224
  %226 = vmatmul.f32.gmra.mxu0 %v160
  %v227 = vpop.f32.mrf.mxu0
  %v228 = vadd.f32 %v202, %v227
  %229 = vmatmul.f32.gmra.mxu0 %v163
  %v230 = vpop.f32.mrf.mxu0
  %v231 = vadd.f32 %v202, %v230
  %232 = vdwg.mxu0
  %v233 = vld [vmem:[%s2] sm:$0xff]
  %v234 = vld [vmem:[%s2 + $0x8] sm:$0xff]
  %v235 = vld [vmem:[%s2 + $0x10] sm:$0xff]
  %v236 = vld [vmem:[%s2 + $0x18] sm:$0xff]
  %v237 = vld [vmem:[%s5] sm:$0xff]
  %v238 = vld [vmem:[%s5 + $0x8] sm:$0xff]
  %v239 = vld [vmem:[%s5 + $0x10] sm:$0xff]
  %v240 = vld [vmem:[%s5 + $0x18] sm:$0xff]
  %v241 = vld [vmem:[%s8] sm:$0x1]
  %v243 = vperm.slane %v241, 0
  %v246 = vsel %vm60, %v233, 0
  %v249 = vsel %vm60, %v234, 0
  %v252 = vsel %vm60, %v235, 0
  %v255 = vsel %vm60, %v236, 0
  %257 = vmatpush.msra.mxu0 0.0
  %258 = vmatpush.msra.mxu0 0.0
  %259 = vmatpush.msra.mxu0 0.0
  %260 = vmatpush.msra.mxu0 0.0
  %261 = vmatpush.msra.mxu0 0.0
  %262 = vmatpush.msra.mxu0 0.0
  %263 = vmatpush.msra.mxu0 0.0
  %264 = vmatpush.msra.mxu0 0.0
  %265 = vmatpush.msra.mxu0 0.0
  %266 = vmatpush.msra.mxu0 0.0
  %267 = vmatpush.msra.mxu0 0.0
  %268 = vmatpush.msra.mxu0 0.0
  %269 = vmatpush.msra.mxu0 %v240
  %270 = vmatpush.msra.mxu0 %v239
  %271 = vmatpush.msra.mxu0 %v238
  %272 = vmatpush.msra.mxu0 %v237
  %273 = vmatmul.f32.gmra.mxu0 %v246
  %v274 = vpop.f32.mrf.mxu0
  %v275 = vadd.f32 %v243, %v274
  %276 = vmatmul.f32.gmra.mxu0 %v249
  %v277 = vpop.f32.mrf.mxu0
  %v278 = vadd.f32 %v243, %v277
  %279 = vmatmul.f32.gmra.mxu0 %v252
  %v280 = vpop.f32.mrf.mxu0
  %v281 = vadd.f32 %v243, %v280
  %282 = vmatmul.f32.gmra.mxu0 %v255
  %v283 = vpop.f32.mrf.mxu0
  %v284 = vadd.f32 %v243, %v283
  %285 = vdwg.mxu0
  %s286 = scalar_lea.vmem %s5, 32
  %v287 = vld [vmem:[%s286] sm:$0xff]
  %v288 = vld [vmem:[%s286 + $0x8] sm:$0xff]
  %v289 = vld [vmem:[%s286 + $0x10] sm:$0xff]
  %v290 = vld [vmem:[%s286 + $0x18] sm:$0xff]
  %s291 = scalar_lea.vmem %s8, 1
  %v292 = vld [vmem:[%s291] sm:$0x1]
  %v294 = vperm.slane %v292, 0
  %296 = vmatpush.msra.mxu0 0.0
  %297 = vmatpush.msra.mxu0 0.0
  %298 = vmatpush.msra.mxu0 0.0
  %299 = vmatpush.msra.mxu0 0.0
  %300 = vmatpush.msra.mxu0 0.0
  %301 = vmatpush.msra.mxu0 0.0
  %302 = vmatpush.msra.mxu0 0.0
  %303 = vmatpush.msra.mxu0 0.0
  %304 = vmatpush.msra.mxu0 0.0
  %305 = vmatpush.msra.mxu0 0.0
  %306 = vmatpush.msra.mxu0 0.0
  %307 = vmatpush.msra.mxu0 0.0
  %308 = vmatpush.msra.mxu0 %v290
  %309 = vmatpush.msra.mxu0 %v289
  %310 = vmatpush.msra.mxu0 %v288
  %311 = vmatpush.msra.mxu0 %v287
  %312 = vmatmul.f32.gmra.mxu0 %v246
  %v313 = vpop.f32.mrf.mxu0
  %v314 = vadd.f32 %v294, %v313
  %315 = vmatmul.f32.gmra.mxu0 %v249
  %v316 = vpop.f32.mrf.mxu0
  %v317 = vadd.f32 %v294, %v316
  %318 = vmatmul.f32.gmra.mxu0 %v252
  %v319 = vpop.f32.mrf.mxu0
  %v320 = vadd.f32 %v294, %v319
  %321 = vmatmul.f32.gmra.mxu0 %v255
  %v322 = vpop.f32.mrf.mxu0
  %v323 = vadd.f32 %v294, %v322
  %324 = vdwg.mxu0
  %325 = vxpose.xlu0.b32.start [1/16] %v91, 128
  %326 = vxpose.xlu0.b32.cont [2/16] 0.0, 128
  %327 = vxpose.xlu0.b32.cont [3/16] 0.0, 128
  %328 = vxpose.xlu0.b32.cont [4/16] 0.0, 128
  %329 = vxpose.xlu0.b32.cont [5/16] 0.0, 128
  %330 = vxpose.xlu0.b32.cont [6/16] 0.0, 128
  %331 = vxpose.xlu0.b32.cont [7/16] 0.0, 128
  %332 = vxpose.xlu0.b32.cont [8/16] 0.0, 128
  %333 = vxpose.xlu0.b32.cont [9/16] 0.0, 128
  %334 = vxpose.xlu0.b32.cont [10/16] 0.0, 128
  %335 = vxpose.xlu0.b32.cont [11/16] 0.0, 128
  %336 = vxpose.xlu0.b32.cont [12/16] 0.0, 128
  %337 = vxpose.xlu0.b32.cont [13/16] 0.0, 128
  %338 = vxpose.xlu0.b32.cont [14/16] 0.0, 128
  %339 = vxpose.xlu0.b32.cont [15/16] 0.0, 128
  %340 = vxpose.xlu0.b32.end [16/16] 0.0, 128
  %v341 = vpop.trf.xlu0
  %v342 = vpop.trf.xlu0
  %v343 = vpop.trf.xlu0
  %v344 = vpop.trf.xlu0
  %v345 = vpop.trf.xlu0
  %v346 = vpop.trf.xlu0
  %v347 = vpop.trf.xlu0
  %v348 = vpop.trf.xlu0
  %v349 = vpop.trf.xlu0
  %v350 = vpop.trf.xlu0
  %v351 = vpop.trf.xlu0
  %v352 = vpop.trf.xlu0
  %v353 = vpop.trf.xlu0
  %v354 = vpop.trf.xlu0
  %v355 = vpop.trf.xlu0
  %v356 = vpop.trf.xlu0
  %vm357 = vcmask 64512
  %v359 = vsel %vm357, %v341, 0
  %v362 = vsel %vm357, %v342, 0
  %364 = vmatpush.msra.mxu0 0.0
  %365 = vmatpush.msra.mxu0 0.0
  %366 = vmatpush.msra.mxu0 0.0
  %367 = vmatpush.msra.mxu0 0.0
  %368 = vmatpush.msra.mxu0 0.0
  %369 = vmatpush.msra.mxu0 0.0
  %370 = vmatpush.msra.mxu0 0.0
  %371 = vmatpush.msra.mxu0 0.0
  %372 = vmatpush.msra.mxu0 0.0
  %373 = vmatpush.msra.mxu0 0.0
  %374 = vmatpush.msra.mxu0 0.0
  %375 = vmatpush.msra.mxu0 0.0
  %376 = vmatpush.msra.mxu0 0.0
  %377 = vmatpush.msra.mxu0 0.0
  %378 = vmatpush.msra.mxu0 0.0
  %379 = vmatpush.msra.mxu0 %v183
  %380 = vmatmul.f32.gmra.mxu0 %v359
  %v381 = vpop.f32.mrf.mxu0
  %v382 = vadd.f32 %v44, %v381
  %383 = vmatmul.f32.gmra.mxu0 %v362
  %v384 = vpop.f32.mrf.mxu0
  %v385 = vadd.f32 %v45, %v384
  %386 = vdwg.mxu0
  %vm387 = vcmask 130048
  %v388 = vsel %vm387, %v382, -inf
  %389 = vmax.xlane.f32.xlu0 %v388
  %v390 = vpop.xlane.xlu0 %389
  %v391 = vsel %vm387, %v385, -inf
  %392 = vmax.xlane.f32.xlu0 %v391
  %v393 = vpop.xlane.xlu0 %392
  %v394 = vsub.f32 %v382, %v390
  %v395 = vsub.f32 %v385, %v393
  %v396 = vmul.f32 %v394, 1.442695
  %v397 = vpow.pop %v396
  %v398 = vmul.f32 %v395, 1.442695
  %v399 = vpow.pop %v398
  %v400 = vmul.f32 %v397, %v46
  %v401 = vmul.f32 %v399, %v47
  %v402 = vsel %vm387, %v400, 0.0
  %403 = vadd.xlane.f32.xlu0 %v402
  %v404 = vpop.xlane.xlu0 %403
  %v405 = vsel %vm387, %v401, 0.0
  %406 = vadd.xlane.f32.xlu0 %v405
  %v407 = vpop.xlane.xlu0 %406
  %vm408 = vcmp.gt.f32.partialorder %v404, 0.0
  %vm409 = vcmp.gt.f32.partialorder %v407, 0.0
  %v410 = vsel %vm408, %v404, 1.0
  %v411 = vsel %vm409, %v407, 1.0
  %v412 = vrcp.pop %v410
  %v413 = vrcp.pop %v411
  %v414 = vmul.f32 %v400, %v412
  %v415 = vmul.f32 %v401, %v413
  %v417 = vsel %vm387, %v275, 0
  %v420 = vsel %vm387, %v414, 0
  %v423 = vsel %vm387, %v415, 0
  %425 = vmatpush.xpose.msra.mxu0 0.0
  %426 = vmatpush.xpose.msra.mxu0 0.0
  %427 = vmatpush.xpose.msra.mxu0 0.0
  %428 = vmatpush.xpose.msra.mxu0 0.0
  %429 = vmatpush.xpose.msra.mxu0 0.0
  %430 = vmatpush.xpose.msra.mxu0 0.0
  %431 = vmatpush.xpose.msra.mxu0 0.0
  %432 = vmatpush.xpose.msra.mxu0 0.0
  %433 = vmatpush.xpose.msra.mxu0 0.0
  %434 = vmatpush.xpose.msra.mxu0 0.0
  %435 = vmatpush.xpose.msra.mxu0 0.0
  %436 = vmatpush.xpose.msra.mxu0 0.0
  %437 = vmatpush.xpose.msra.mxu0 0.0
  %438 = vmatpush.xpose.msra.mxu0 0.0
  %439 = vmatpush.xpose.msra.mxu0 %v423
  %440 = vmatpush.xpose.msra.mxu0 %v420
  %441 = vmatmul.f32.gmra.mxu0 %v417
  %v442 = vpop.f32.mrf.mxu0
  %v443 = vadd.f32 0.0, %v442
  %444 = vdwg.mxu0
  %v445 = vld [vmem:[%s9] sm:$0xff]
  %v446 = vld [vmem:[%s9 + $0x8] sm:$0xff]
  %v447 = vld [vmem:[%s9 + $0x10] sm:$0xff]
  %v448 = vld [vmem:[%s9 + $0x18] sm:$0xff]
  %449 = vxpose.xlu0.b32.start [1/16] %v94, 128
  %450 = vxpose.xlu0.b32.cont [2/16] 0.0, 128
  %451 = vxpose.xlu0.b32.cont [3/16] 0.0, 128
  %452 = vxpose.xlu0.b32.cont [4/16] 0.0, 128
  %453 = vxpose.xlu0.b32.cont [5/16] 0.0, 128
  %454 = vxpose.xlu0.b32.cont [6/16] 0.0, 128
  %455 = vxpose.xlu0.b32.cont [7/16] 0.0, 128
  %456 = vxpose.xlu0.b32.cont [8/16] 0.0, 128
  %457 = vxpose.xlu0.b32.cont [9/16] 0.0, 128
  %458 = vxpose.xlu0.b32.cont [10/16] 0.0, 128
  %459 = vxpose.xlu0.b32.cont [11/16] 0.0, 128
  %460 = vxpose.xlu0.b32.cont [12/16] 0.0, 128
  %461 = vxpose.xlu0.b32.cont [13/16] 0.0, 128
  %462 = vxpose.xlu0.b32.cont [14/16] 0.0, 128
  %463 = vxpose.xlu0.b32.cont [15/16] 0.0, 128
  %464 = vxpose.xlu0.b32.end [16/16] 0.0, 128
  %v465 = vpop.trf.xlu0
  %v466 = vpop.trf.xlu0
  %v467 = vpop.trf.xlu0
  %v468 = vpop.trf.xlu0
  %v469 = vpop.trf.xlu0
  %v470 = vpop.trf.xlu0
  %v471 = vpop.trf.xlu0
  %v472 = vpop.trf.xlu0
  %v473 = vpop.trf.xlu0
  %v474 = vpop.trf.xlu0
  %v475 = vpop.trf.xlu0
  %v476 = vpop.trf.xlu0
  %v477 = vpop.trf.xlu0
  %v478 = vpop.trf.xlu0
  %v479 = vpop.trf.xlu0
  %v480 = vpop.trf.xlu0
  %v482 = vsel %vm357, %v465, 0
  %v485 = vsel %vm357, %v466, 0
  %487 = vmatpush.msra.mxu0 0.0
  %488 = vmatpush.msra.mxu0 0.0
  %489 = vmatpush.msra.mxu0 0.0
  %490 = vmatpush.msra.mxu0 0.0
  %491 = vmatpush.msra.mxu0 0.0
  %492 = vmatpush.msra.mxu0 0.0
  %493 = vmatpush.msra.mxu0 0.0
  %494 = vmatpush.msra.mxu0 0.0
  %495 = vmatpush.msra.mxu0 0.0
  %496 = vmatpush.msra.mxu0 0.0
  %497 = vmatpush.msra.mxu0 0.0
  %498 = vmatpush.msra.mxu0 0.0
  %499 = vmatpush.msra.mxu0 0.0
  %500 = vmatpush.msra.mxu0 0.0
  %501 = vmatpush.msra.mxu0 0.0
  %502 = vmatpush.msra.mxu0 %v186
  %503 = vmatmul.f32.gmra.mxu0 %v482
  %v504 = vpop.f32.mrf.mxu0
  %v505 = vadd.f32 %v44, %v504
  %506 = vmatmul.f32.gmra.mxu0 %v485
  %v507 = vpop.f32.mrf.mxu0
  %v508 = vadd.f32 %v45, %v507
  %509 = vdwg.mxu0
  %v510 = vsel %vm387, %v505, -inf
  %511 = vmax.xlane.f32.xlu0 %v510
  %v512 = vpop.xlane.xlu0 %511
  %v513 = vsel %vm387, %v508, -inf
  %514 = vmax.xlane.f32.xlu0 %v513
  %v515 = vpop.xlane.xlu0 %514
  %v516 = vsub.f32 %v505, %v512
  %v517 = vsub.f32 %v508, %v515
  %v518 = vmul.f32 %v516, 1.442695
  %v519 = vpow.pop %v518
  %v520 = vmul.f32 %v517, 1.442695
  %v521 = vpow.pop %v520
  %v522 = vmul.f32 %v519, %v46
  %v523 = vmul.f32 %v521, %v47
  %v524 = vsel %vm387, %v522, 0.0
  %525 = vadd.xlane.f32.xlu0 %v524
  %v526 = vpop.xlane.xlu0 %525
  %v527 = vsel %vm387, %v523, 0.0
  %528 = vadd.xlane.f32.xlu0 %v527
  %v529 = vpop.xlane.xlu0 %528
  %vm530 = vcmp.gt.f32.partialorder %v526, 0.0
  %vm531 = vcmp.gt.f32.partialorder %v529, 0.0
  %v532 = vsel %vm530, %v526, 1.0
  %v533 = vsel %vm531, %v529, 1.0
  %v534 = vrcp.pop %v532
  %v535 = vrcp.pop %v533
  %v536 = vmul.f32 %v522, %v534
  %v537 = vmul.f32 %v523, %v535
  %v539 = vsel %vm387, %v278, 0
  %v542 = vsel %vm387, %v536, 0
  %v545 = vsel %vm387, %v537, 0
  %547 = vmatpush.xpose.msra.mxu0 0.0
  %548 = vmatpush.xpose.msra.mxu0 0.0
  %549 = vmatpush.xpose.msra.mxu0 0.0
  %550 = vmatpush.xpose.msra.mxu0 0.0
  %551 = vmatpush.xpose.msra.mxu0 0.0
  %552 = vmatpush.xpose.msra.mxu0 0.0
  %553 = vmatpush.xpose.msra.mxu0 0.0
  %554 = vmatpush.xpose.msra.mxu0 0.0
  %555 = vmatpush.xpose.msra.mxu0 0.0
  %556 = vmatpush.xpose.msra.mxu0 0.0
  %557 = vmatpush.xpose.msra.mxu0 0.0
  %558 = vmatpush.xpose.msra.mxu0 0.0
  %559 = vmatpush.xpose.msra.mxu0 0.0
  %560 = vmatpush.xpose.msra.mxu0 0.0
  %561 = vmatpush.xpose.msra.mxu0 %v545
  %562 = vmatpush.xpose.msra.mxu0 %v542
  %563 = vmatmul.f32.gmra.mxu0 %v539
  %v564 = vpop.f32.mrf.mxu0
  %v565 = vadd.f32 0.0, %v564
  %566 = vdwg.mxu0
  %s567 = scalar_lea.vmem %s9, 32
  %v568 = vld [vmem:[%s567] sm:$0xff]
  %v569 = vld [vmem:[%s567 + $0x8] sm:$0xff]
  %v570 = vld [vmem:[%s567 + $0x10] sm:$0xff]
  %v571 = vld [vmem:[%s567 + $0x18] sm:$0xff]
  %v573 = vsel %vm357, %v568, 0
  %v576 = vsel %vm357, %v569, 0
  %v579 = vsel %vm357, %v570, 0
  %v582 = vsel %vm357, %v571, 0
  %584 = vmatpush.msra.mxu0 0.0
  %585 = vmatpush.msra.mxu0 0.0
  %586 = vmatpush.msra.mxu0 0.0
  %587 = vmatpush.msra.mxu0 0.0
  %588 = vmatpush.msra.mxu0 0.0
  %589 = vmatpush.msra.mxu0 0.0
  %590 = vmatpush.msra.mxu0 0.0
  %591 = vmatpush.msra.mxu0 0.0
  %592 = vmatpush.msra.mxu0 0.0
  %593 = vmatpush.msra.mxu0 0.0
  %594 = vmatpush.msra.mxu0 0.0
  %595 = vmatpush.msra.mxu0 0.0
  %596 = vmatpush.msra.mxu0 0.0
  %597 = vmatpush.msra.mxu0 0.0
  %598 = vmatpush.msra.mxu0 0.0
  %599 = vmatpush.msra.mxu0 %v565
  %600 = vmatmul.f32.gmra.mxu0 %v573
  %v601 = vpop.f32.mrf.mxu0
  %v602 = vadd.f32 0.0, %v601
  %603 = vmatmul.f32.gmra.mxu0 %v576
  %v604 = vpop.f32.mrf.mxu0
  %v605 = vadd.f32 0.0, %v604
  %606 = vmatmul.f32.gmra.mxu0 %v579
  %v607 = vpop.f32.mrf.mxu0
  %v608 = vadd.f32 0.0, %v607
  %609 = vmatmul.f32.gmra.mxu0 %v582
  %v610 = vpop.f32.mrf.mxu0
  %v611 = vadd.f32 0.0, %v610
  %612 = vdwg.mxu0
  %v614 = vsel %vm357, %v445, 0
  %v617 = vsel %vm357, %v446, 0
  %v620 = vsel %vm357, %v447, 0
  %v623 = vsel %vm357, %v448, 0
  %625 = vmatpush.msra.mxu0 0.0
  %626 = vmatpush.msra.mxu0 0.0
  %627 = vmatpush.msra.mxu0 0.0
  %628 = vmatpush.msra.mxu0 0.0
  %629 = vmatpush.msra.mxu0 0.0
  %630 = vmatpush.msra.mxu0 0.0
  %631 = vmatpush.msra.mxu0 0.0
  %632 = vmatpush.msra.mxu0 0.0
  %633 = vmatpush.msra.mxu0 0.0
  %634 = vmatpush.msra.mxu0 0.0
  %635 = vmatpush.msra.mxu0 0.0
  %636 = vmatpush.msra.mxu0 0.0
  %637 = vmatpush.msra.mxu0 0.0
  %638 = vmatpush.msra.mxu0 0.0
  %639 = vmatpush.msra.mxu0 0.0
  %640 = vmatpush.msra.mxu0 %v443
  %641 = vmatmul.f32.gmra.mxu0 %v614
  %v642 = vpop.f32.mrf.mxu0
  %v643 = vadd.f32 %v602, %v642
  %644 = vmatmul.f32.gmra.mxu0 %v617
  %v645 = vpop.f32.mrf.mxu0
  %v646 = vadd.f32 %v605, %v645
  %647 = vmatmul.f32.gmra.mxu0 %v620
  %v648 = vpop.f32.mrf.mxu0
  %v649 = vadd.f32 %v608, %v648
  %650 = vmatmul.f32.gmra.mxu0 %v623
  %v651 = vpop.f32.mrf.mxu0
  %v652 = vadd.f32 %v611, %v651
  %653 = vdwg.mxu0
  %654 = vxpose.xlu0.b32.start [1/16] %v130, 128
  %655 = vxpose.xlu0.b32.cont [2/16] 0.0, 128
  %656 = vxpose.xlu0.b32.cont [3/16] 0.0, 128
  %657 = vxpose.xlu0.b32.cont [4/16] 0.0, 128
  %658 = vxpose.xlu0.b32.cont [5/16] 0.0, 128
  %659 = vxpose.xlu0.b32.cont [6/16] 0.0, 128
  %660 = vxpose.xlu0.b32.cont [7/16] 0.0, 128
  %661 = vxpose.xlu0.b32.cont [8/16] 0.0, 128
  %662 = vxpose.xlu0.b32.cont [9/16] 0.0, 128
  %663 = vxpose.xlu0.b32.cont [10/16] 0.0, 128
  %664 = vxpose.xlu0.b32.cont [11/16] 0.0, 128
  %665 = vxpose.xlu0.b32.cont [12/16] 0.0, 128
  %666 = vxpose.xlu0.b32.cont [13/16] 0.0, 128
  %667 = vxpose.xlu0.b32.cont [14/16] 0.0, 128
  %668 = vxpose.xlu0.b32.cont [15/16] 0.0, 128
  %669 = vxpose.xlu0.b32.end [16/16] 0.0, 128
  %v670 = vpop.trf.xlu0
  %v671 = vpop.trf.xlu0
  %v672 = vpop.trf.xlu0
  %v673 = vpop.trf.xlu0
  %v674 = vpop.trf.xlu0
  %v675 = vpop.trf.xlu0
  %v676 = vpop.trf.xlu0
  %v677 = vpop.trf.xlu0
  %v678 = vpop.trf.xlu0
  %v679 = vpop.trf.xlu0
  %v680 = vpop.trf.xlu0
  %v681 = vpop.trf.xlu0
  %v682 = vpop.trf.xlu0
  %v683 = vpop.trf.xlu0
  %v684 = vpop.trf.xlu0
  %v685 = vpop.trf.xlu0
  %v687 = vsel %vm357, %v670, 0
  %v690 = vsel %vm357, %v671, 0
  %692 = vmatpush.msra.mxu0 0.0
  %693 = vmatpush.msra.mxu0 0.0
  %694 = vmatpush.msra.mxu0 0.0
  %695 = vmatpush.msra.mxu0 0.0
  %696 = vmatpush.msra.mxu0 0.0
  %697 = vmatpush.msra.mxu0 0.0
  %698 = vmatpush.msra.mxu0 0.0
  %699 = vmatpush.msra.mxu0 0.0
  %700 = vmatpush.msra.mxu0 0.0
  %701 = vmatpush.msra.mxu0 0.0
  %702 = vmatpush.msra.mxu0 0.0
  %703 = vmatpush.msra.mxu0 0.0
  %704 = vmatpush.msra.mxu0 0.0
  %705 = vmatpush.msra.mxu0 0.0
  %706 = vmatpush.msra.mxu0 0.0
  %707 = vmatpush.msra.mxu0 %v222
  %708 = vmatmul.f32.gmra.mxu0 %v687
  %v709 = vpop.f32.mrf.mxu0
  %v710 = vadd.f32 %v44, %v709
  %711 = vmatmul.f32.gmra.mxu0 %v690
  %v712 = vpop.f32.mrf.mxu0
  %v713 = vadd.f32 %v45, %v712
  %714 = vdwg.mxu0
  %v715 = vsel %vm387, %v710, -inf
  %716 = vmax.xlane.f32.xlu0 %v715
  %v717 = vpop.xlane.xlu0 %716
  %v718 = vsel %vm387, %v713, -inf
  %719 = vmax.xlane.f32.xlu0 %v718
  %v720 = vpop.xlane.xlu0 %719
  %v721 = vsub.f32 %v710, %v717
  %v722 = vsub.f32 %v713, %v720
  %v723 = vmul.f32 %v721, 1.442695
  %v724 = vpow.pop %v723
  %v725 = vmul.f32 %v722, 1.442695
  %v726 = vpow.pop %v725
  %v727 = vmul.f32 %v724, %v46
  %v728 = vmul.f32 %v726, %v47
  %v729 = vsel %vm387, %v727, 0.0
  %730 = vadd.xlane.f32.xlu0 %v729
  %v731 = vpop.xlane.xlu0 %730
  %v732 = vsel %vm387, %v728, 0.0
  %733 = vadd.xlane.f32.xlu0 %v732
  %v734 = vpop.xlane.xlu0 %733
  %vm735 = vcmp.gt.f32.partialorder %v731, 0.0
  %vm736 = vcmp.gt.f32.partialorder %v734, 0.0
  %v737 = vsel %vm735, %v731, 1.0
  %v738 = vsel %vm736, %v734, 1.0
  %v739 = vrcp.pop %v737
  %v740 = vrcp.pop %v738
  %v741 = vmul.f32 %v727, %v739
  %v742 = vmul.f32 %v728, %v740
  %v744 = vsel %vm387, %v314, 0
  %v747 = vsel %vm387, %v741, 0
  %v750 = vsel %vm387, %v742, 0
  %752 = vmatpush.xpose.msra.mxu0 0.0
  %753 = vmatpush.xpose.msra.mxu0 0.0
  %754 = vmatpush.xpose.msra.mxu0 0.0
  %755 = vmatpush.xpose.msra.mxu0 0.0
  %756 = vmatpush.xpose.msra.mxu0 0.0
  %757 = vmatpush.xpose.msra.mxu0 0.0
  %758 = vmatpush.xpose.msra.mxu0 0.0
  %759 = vmatpush.xpose.msra.mxu0 0.0
  %760 = vmatpush.xpose.msra.mxu0 0.0
  %761 = vmatpush.xpose.msra.mxu0 0.0
  %762 = vmatpush.xpose.msra.mxu0 0.0
  %763 = vmatpush.xpose.msra.mxu0 0.0
  %764 = vmatpush.xpose.msra.mxu0 0.0
  %765 = vmatpush.xpose.msra.mxu0 0.0
  %766 = vmatpush.xpose.msra.mxu0 %v750
  %767 = vmatpush.xpose.msra.mxu0 %v747
  %768 = vmatmul.f32.gmra.mxu0 %v744
  %v769 = vpop.f32.mrf.mxu0
  %v770 = vadd.f32 0.0, %v769
  %771 = vdwg.mxu0
  %s772 = scalar_lea.vmem %s9, 64
  %v773 = vld [vmem:[%s772] sm:$0xff]
  %v774 = vld [vmem:[%s772 + $0x8] sm:$0xff]
  %v775 = vld [vmem:[%s772 + $0x10] sm:$0xff]
  %v776 = vld [vmem:[%s772 + $0x18] sm:$0xff]
  %v778 = vsel %vm357, %v773, 0
  %v781 = vsel %vm357, %v774, 0
  %v784 = vsel %vm357, %v775, 0
  %v787 = vsel %vm357, %v776, 0
  %789 = vmatpush.msra.mxu0 0.0
  %790 = vmatpush.msra.mxu0 0.0
  %791 = vmatpush.msra.mxu0 0.0
  %792 = vmatpush.msra.mxu0 0.0
  %793 = vmatpush.msra.mxu0 0.0
  %794 = vmatpush.msra.mxu0 0.0
  %795 = vmatpush.msra.mxu0 0.0
  %796 = vmatpush.msra.mxu0 0.0
  %797 = vmatpush.msra.mxu0 0.0
  %798 = vmatpush.msra.mxu0 0.0
  %799 = vmatpush.msra.mxu0 0.0
  %800 = vmatpush.msra.mxu0 0.0
  %801 = vmatpush.msra.mxu0 0.0
  %802 = vmatpush.msra.mxu0 0.0
  %803 = vmatpush.msra.mxu0 0.0
  %804 = vmatpush.msra.mxu0 %v770
  %805 = vmatmul.f32.gmra.mxu0 %v778
  %v806 = vpop.f32.mrf.mxu0
  %v807 = vadd.f32 0.0, %v806
  %808 = vmatmul.f32.gmra.mxu0 %v781
  %v809 = vpop.f32.mrf.mxu0
  %v810 = vadd.f32 0.0, %v809
  %811 = vmatmul.f32.gmra.mxu0 %v784
  %v812 = vpop.f32.mrf.mxu0
  %v813 = vadd.f32 0.0, %v812
  %814 = vmatmul.f32.gmra.mxu0 %v787
  %v815 = vpop.f32.mrf.mxu0
  %v816 = vadd.f32 0.0, %v815
  %817 = vdwg.mxu0
  %v818 = vadd.f32 %v643, %v807
  %v819 = vadd.f32 %v646, %v810
  %v820 = vadd.f32 %v649, %v813
  %v821 = vadd.f32 %v652, %v816
  %822 = vxpose.xlu0.b32.start [1/16] %v133, 128
  %823 = vxpose.xlu0.b32.cont [2/16] 0.0, 128
  %824 = vxpose.xlu0.b32.cont [3/16] 0.0, 128
  %825 = vxpose.xlu0.b32.cont [4/16] 0.0, 128
  %826 = vxpose.xlu0.b32.cont [5/16] 0.0, 128
  %827 = vxpose.xlu0.b32.cont [6/16] 0.0, 128
  %828 = vxpose.xlu0.b32.cont [7/16] 0.0, 128
  %829 = vxpose.xlu0.b32.cont [8/16] 0.0, 128
  %830 = vxpose.xlu0.b32.cont [9/16] 0.0, 128
  %831 = vxpose.xlu0.b32.cont [10/16] 0.0, 128
  %832 = vxpose.xlu0.b32.cont [11/16] 0.0, 128
  %833 = vxpose.xlu0.b32.cont [12/16] 0.0, 128
  %834 = vxpose.xlu0.b32.cont [13/16] 0.0, 128
  %835 = vxpose.xlu0.b32.cont [14/16] 0.0, 128
  %836 = vxpose.xlu0.b32.cont [15/16] 0.0, 128
  %837 = vxpose.xlu0.b32.end [16/16] 0.0, 128
  %v838 = vpop.trf.xlu0
  %v839 = vpop.trf.xlu0
  %v840 = vpop.trf.xlu0
  %v841 = vpop.trf.xlu0
  %v842 = vpop.trf.xlu0
  %v843 = vpop.trf.xlu0
  %v844 = vpop.trf.xlu0
  %v845 = vpop.trf.xlu0
  %v846 = vpop.trf.xlu0
  %v847 = vpop.trf.xlu0
  %v848 = vpop.trf.xlu0
  %v849 = vpop.trf.xlu0
  %v850 = vpop.trf.xlu0
  %v851 = vpop.trf.xlu0
  %v852 = vpop.trf.xlu0
  %v853 = vpop.trf.xlu0
  %v855 = vsel %vm357, %v838, 0
  %v858 = vsel %vm357, %v839, 0
  %860 = vmatpush.msra.mxu0 0.0
  %861 = vmatpush.msra.mxu0 0.0
  %862 = vmatpush.msra.mxu0 0.0
  %863 = vmatpush.msra.mxu0 0.0
  %864 = vmatpush.msra.mxu0 0.0
  %865 = vmatpush.msra.mxu0 0.0
  %866 = vmatpush.msra.mxu0 0.0
  %867 = vmatpush.msra.mxu0 0.0
  %868 = vmatpush.msra.mxu0 0.0
  %869 = vmatpush.msra.mxu0 0.0
  %870 = vmatpush.msra.mxu0 0.0
  %871 = vmatpush.msra.mxu0 0.0
  %872 = vmatpush.msra.mxu0 0.0
  %873 = vmatpush.msra.mxu0 0.0
  %874 = vmatpush.msra.mxu0 0.0
  %875 = vmatpush.msra.mxu0 %v225
  %876 = vmatmul.f32.gmra.mxu0 %v855
  %v877 = vpop.f32.mrf.mxu0
  %v878 = vadd.f32 %v44, %v877
  %879 = vmatmul.f32.gmra.mxu0 %v858
  %v880 = vpop.f32.mrf.mxu0
  %v881 = vadd.f32 %v45, %v880
  %882 = vdwg.mxu0
  %v883 = vsel %vm387, %v878, -inf
  %884 = vmax.xlane.f32.xlu0 %v883
  %v885 = vpop.xlane.xlu0 %884
  %v886 = vsel %vm387, %v881, -inf
  %887 = vmax.xlane.f32.xlu0 %v886
  %v888 = vpop.xlane.xlu0 %887
  %v889 = vsub.f32 %v878, %v885
  %v890 = vsub.f32 %v881, %v888
  %v891 = vmul.f32 %v889, 1.442695
  %v892 = vpow.pop %v891
  %v893 = vmul.f32 %v890, 1.442695
  %v894 = vpow.pop %v893
  %v895 = vmul.f32 %v892, %v46
  %v896 = vmul.f32 %v894, %v47
  %v897 = vsel %vm387, %v895, 0.0
  %898 = vadd.xlane.f32.xlu0 %v897
  %v899 = vpop.xlane.xlu0 %898
  %v900 = vsel %vm387, %v896, 0.0
  %901 = vadd.xlane.f32.xlu0 %v900
  %v902 = vpop.xlane.xlu0 %901
  %vm903 = vcmp.gt.f32.partialorder %v899, 0.0
  %vm904 = vcmp.gt.f32.partialorder %v902, 0.0
  %v905 = vsel %vm903, %v899, 1.0
  %v906 = vsel %vm904, %v902, 1.0
  %v907 = vrcp.pop %v905
  %v908 = vrcp.pop %v906
  %v909 = vmul.f32 %v895, %v907
  %v910 = vmul.f32 %v896, %v908
  %v912 = vsel %vm387, %v317, 0
  %v915 = vsel %vm387, %v909, 0
  %v918 = vsel %vm387, %v910, 0
  %920 = vmatpush.xpose.msra.mxu0 0.0
  %921 = vmatpush.xpose.msra.mxu0 0.0
  %922 = vmatpush.xpose.msra.mxu0 0.0
  %923 = vmatpush.xpose.msra.mxu0 0.0
  %924 = vmatpush.xpose.msra.mxu0 0.0
  %925 = vmatpush.xpose.msra.mxu0 0.0
  %926 = vmatpush.xpose.msra.mxu0 0.0
  %927 = vmatpush.xpose.msra.mxu0 0.0
  %928 = vmatpush.xpose.msra.mxu0 0.0
  %929 = vmatpush.xpose.msra.mxu0 0.0
  %930 = vmatpush.xpose.msra.mxu0 0.0
  %931 = vmatpush.xpose.msra.mxu0 0.0
  %932 = vmatpush.xpose.msra.mxu0 0.0
  %933 = vmatpush.xpose.msra.mxu0 0.0
  %934 = vmatpush.xpose.msra.mxu0 %v918
  %935 = vmatpush.xpose.msra.mxu0 %v915
  %936 = vmatmul.f32.gmra.mxu0 %v912
  %v937 = vpop.f32.mrf.mxu0
  %v938 = vadd.f32 0.0, %v937
  %939 = vdwg.mxu0
  %s940 = scalar_lea.vmem %s9, 96
  %v941 = vld [vmem:[%s940] sm:$0xff]
  %v942 = vld [vmem:[%s940 + $0x8] sm:$0xff]
  %v943 = vld [vmem:[%s940 + $0x10] sm:$0xff]
  %v944 = vld [vmem:[%s940 + $0x18] sm:$0xff]
  %v946 = vsel %vm357, %v941, 0
  %v949 = vsel %vm357, %v942, 0
  %v952 = vsel %vm357, %v943, 0
  %v955 = vsel %vm357, %v944, 0
  %957 = vmatpush.msra.mxu0 0.0
  %958 = vmatpush.msra.mxu0 0.0
  %959 = vmatpush.msra.mxu0 0.0
  %960 = vmatpush.msra.mxu0 0.0
  %961 = vmatpush.msra.mxu0 0.0
  %962 = vmatpush.msra.mxu0 0.0
  %963 = vmatpush.msra.mxu0 0.0
  %964 = vmatpush.msra.mxu0 0.0
  %965 = vmatpush.msra.mxu0 0.0
  %966 = vmatpush.msra.mxu0 0.0
  %967 = vmatpush.msra.mxu0 0.0
  %968 = vmatpush.msra.mxu0 0.0
  %969 = vmatpush.msra.mxu0 0.0
  %970 = vmatpush.msra.mxu0 0.0
  %971 = vmatpush.msra.mxu0 0.0
  %972 = vmatpush.msra.mxu0 %v938
  %973 = vmatmul.f32.gmra.mxu0 %v946
  %v974 = vpop.f32.mrf.mxu0
  %v975 = vadd.f32 0.0, %v974
  %976 = vmatmul.f32.gmra.mxu0 %v949
  %v977 = vpop.f32.mrf.mxu0
  %v978 = vadd.f32 0.0, %v977
  %979 = vmatmul.f32.gmra.mxu0 %v952
  %v980 = vpop.f32.mrf.mxu0
  %v981 = vadd.f32 0.0, %v980
  %982 = vmatmul.f32.gmra.mxu0 %v955
  %v983 = vpop.f32.mrf.mxu0
  %v984 = vadd.f32 0.0, %v983
  %985 = vdwg.mxu0
  %v986 = vadd.f32 %v818, %v975
  %v987 = vadd.f32 %v819, %v978
  %v988 = vadd.f32 %v820, %v981
  %v989 = vadd.f32 %v821, %v984
  %v990 = vld [vmem:[%s10] sm:$0xff]
  %v991 = vld [vmem:[%s10 + $0x8] sm:$0xff]
  %v992 = vld [vmem:[%s10 + $0x10] sm:$0xff]
  %v993 = vld [vmem:[%s10 + $0x18] sm:$0xff]
  %995 = vset.pattern.permute.xlu0 0
  %996 = vperm.xlu0 %995, %v990
  %v997 = vpop.permute.xlu0 %996
  %1000 = vset.pattern.permute.xlu0 0
  %1001 = vperm.xlu0 %1000, %v991
  %v1002 = vpop.permute.xlu0 %1001
  %1005 = vset.pattern.permute.xlu0 0
  %1006 = vperm.xlu0 %1005, %v992
  %v1007 = vpop.permute.xlu0 %1006
  %1010 = vset.pattern.permute.xlu0 0
  %1011 = vperm.xlu0 %1010, %v993
  %v1012 = vpop.permute.xlu0 %1011
  %v1014 = vadd.f32 %v986, %v997
  %v1015 = vadd.f32 %v987, %v1002
  %v1016 = vadd.f32 %v988, %v1007
  %v1017 = vadd.f32 %v989, %v1012
  %1018 = vst.msk [vmem:[%s13] sm:$0xff] %vm387, %v1014
  %1019 = vst.msk [vmem:[%s13 + $0x8] sm:$0xff] %vm387, %v1015
  %1020 = vst.msk [vmem:[%s13 + $0x10] sm:$0xff] %vm387, %v1016
  %1021 = vst.msk [vmem:[%s13 + $0x18] sm:$0xff] %vm387, %v1017
  %1022 = vxpose.xlu0.b32.start [1/16] %v97, 128
  %1023 = vxpose.xlu0.b32.cont [2/16] 0.0, 128
  %1024 = vxpose.xlu0.b32.cont [3/16] 0.0, 128
  %1025 = vxpose.xlu0.b32.cont [4/16] 0.0, 128
  %1026 = vxpose.xlu0.b32.cont [5/16] 0.0, 128
  %1027 = vxpose.xlu0.b32.cont [6/16] 0.0, 128
  %1028 = vxpose.xlu0.b32.cont [7/16] 0.0, 128
  %1029 = vxpose.xlu0.b32.cont [8/16] 0.0, 128
  %1030 = vxpose.xlu0.b32.cont [9/16] 0.0, 128
  %1031 = vxpose.xlu0.b32.cont [10/16] 0.0, 128
  %1032 = vxpose.xlu0.b32.cont [11/16] 0.0, 128
  %1033 = vxpose.xlu0.b32.cont [12/16] 0.0, 128
  %1034 = vxpose.xlu0.b32.cont [13/16] 0.0, 128
  %1035 = vxpose.xlu0.b32.cont [14/16] 0.0, 128
  %1036 = vxpose.xlu0.b32.cont [15/16] 0.0, 128
  %1037 = vxpose.xlu0.b32.end [16/16] 0.0, 128
  %v1038 = vpop.trf.xlu0
  %v1039 = vpop.trf.xlu0
  %v1040 = vpop.trf.xlu0
  %v1041 = vpop.trf.xlu0
  %v1042 = vpop.trf.xlu0
  %v1043 = vpop.trf.xlu0
  %v1044 = vpop.trf.xlu0
  %v1045 = vpop.trf.xlu0
  %v1046 = vpop.trf.xlu0
  %v1047 = vpop.trf.xlu0
  %v1048 = vpop.trf.xlu0
  %v1049 = vpop.trf.xlu0
  %v1050 = vpop.trf.xlu0
  %v1051 = vpop.trf.xlu0
  %v1052 = vpop.trf.xlu0
  %v1053 = vpop.trf.xlu0
  %v1055 = vsel %vm357, %v1038, 0
  %v1058 = vsel %vm357, %v1039, 0
  %1060 = vmatpush.msra.mxu0 0.0
  %1061 = vmatpush.msra.mxu0 0.0
  %1062 = vmatpush.msra.mxu0 0.0
  %1063 = vmatpush.msra.mxu0 0.0
  %1064 = vmatpush.msra.mxu0 0.0
  %1065 = vmatpush.msra.mxu0 0.0
  %1066 = vmatpush.msra.mxu0 0.0
  %1067 = vmatpush.msra.mxu0 0.0
  %1068 = vmatpush.msra.mxu0 0.0
  %1069 = vmatpush.msra.mxu0 0.0
  %1070 = vmatpush.msra.mxu0 0.0
  %1071 = vmatpush.msra.mxu0 0.0
  %1072 = vmatpush.msra.mxu0 0.0
  %1073 = vmatpush.msra.mxu0 0.0
  %1074 = vmatpush.msra.mxu0 0.0
  %1075 = vmatpush.msra.mxu0 %v189
  %1076 = vmatmul.f32.gmra.mxu0 %v1055
  %v1077 = vpop.f32.mrf.mxu0
  %v1078 = vadd.f32 %v44, %v1077
  %1079 = vmatmul.f32.gmra.mxu0 %v1058
  %v1080 = vpop.f32.mrf.mxu0
  %v1081 = vadd.f32 %v45, %v1080
  %1082 = vdwg.mxu0
  %v1083 = vsel %vm387, %v1078, -inf
  %1084 = vmax.xlane.f32.xlu0 %v1083
  %v1085 = vpop.xlane.xlu0 %1084
  %v1086 = vsel %vm387, %v1081, -inf
  %1087 = vmax.xlane.f32.xlu0 %v1086
  %v1088 = vpop.xlane.xlu0 %1087
  %v1089 = vsub.f32 %v1078, %v1085
  %v1090 = vsub.f32 %v1081, %v1088
  %v1091 = vmul.f32 %v1089, 1.442695
  %v1092 = vpow.pop %v1091
  %v1093 = vmul.f32 %v1090, 1.442695
  %v1094 = vpow.pop %v1093
  %v1095 = vmul.f32 %v1092, %v46
  %v1096 = vmul.f32 %v1094, %v47
  %v1097 = vsel %vm387, %v1095, 0.0
  %1098 = vadd.xlane.f32.xlu0 %v1097
  %v1099 = vpop.xlane.xlu0 %1098
  %v1100 = vsel %vm387, %v1096, 0.0
  %1101 = vadd.xlane.f32.xlu0 %v1100
  %v1102 = vpop.xlane.xlu0 %1101
  %vm1103 = vcmp.gt.f32.partialorder %v1099, 0.0
  %vm1104 = vcmp.gt.f32.partialorder %v1102, 0.0
  %v1105 = vsel %vm1103, %v1099, 1.0
  %v1106 = vsel %vm1104, %v1102, 1.0
  %v1107 = vrcp.pop %v1105
  %v1108 = vrcp.pop %v1106
  %v1109 = vmul.f32 %v1095, %v1107
  %v1110 = vmul.f32 %v1096, %v1108
  %v1112 = vsel %vm387, %v281, 0
  %v1115 = vsel %vm387, %v1109, 0
  %v1118 = vsel %vm387, %v1110, 0
  %1120 = vmatpush.xpose.msra.mxu0 0.0
  %1121 = vmatpush.xpose.msra.mxu0 0.0
  %1122 = vmatpush.xpose.msra.mxu0 0.0
  %1123 = vmatpush.xpose.msra.mxu0 0.0
  %1124 = vmatpush.xpose.msra.mxu0 0.0
  %1125 = vmatpush.xpose.msra.mxu0 0.0
  %1126 = vmatpush.xpose.msra.mxu0 0.0
  %1127 = vmatpush.xpose.msra.mxu0 0.0
  %1128 = vmatpush.xpose.msra.mxu0 0.0
  %1129 = vmatpush.xpose.msra.mxu0 0.0
  %1130 = vmatpush.xpose.msra.mxu0 0.0
  %1131 = vmatpush.xpose.msra.mxu0 0.0
  %1132 = vmatpush.xpose.msra.mxu0 0.0
  %1133 = vmatpush.xpose.msra.mxu0 0.0
  %1134 = vmatpush.xpose.msra.mxu0 %v1118
  %1135 = vmatpush.xpose.msra.mxu0 %v1115
  %1136 = vmatmul.f32.gmra.mxu0 %v1112
  %v1137 = vpop.f32.mrf.mxu0
  %v1138 = vadd.f32 0.0, %v1137
  %1139 = vdwg.mxu0
  %v1140 = vld [vmem:[%s9] sm:$0xff]
  %v1141 = vld [vmem:[%s9 + $0x8] sm:$0xff]
  %v1142 = vld [vmem:[%s9 + $0x10] sm:$0xff]
  %v1143 = vld [vmem:[%s9 + $0x18] sm:$0xff]
  %1144 = vxpose.xlu0.b32.start [1/16] %v100, 128
  %1145 = vxpose.xlu0.b32.cont [2/16] 0.0, 128
  %1146 = vxpose.xlu0.b32.cont [3/16] 0.0, 128
  %1147 = vxpose.xlu0.b32.cont [4/16] 0.0, 128
  %1148 = vxpose.xlu0.b32.cont [5/16] 0.0, 128
  %1149 = vxpose.xlu0.b32.cont [6/16] 0.0, 128
  %1150 = vxpose.xlu0.b32.cont [7/16] 0.0, 128
  %1151 = vxpose.xlu0.b32.cont [8/16] 0.0, 128
  %1152 = vxpose.xlu0.b32.cont [9/16] 0.0, 128
  %1153 = vxpose.xlu0.b32.cont [10/16] 0.0, 128
  %1154 = vxpose.xlu0.b32.cont [11/16] 0.0, 128
  %1155 = vxpose.xlu0.b32.cont [12/16] 0.0, 128
  %1156 = vxpose.xlu0.b32.cont [13/16] 0.0, 128
  %1157 = vxpose.xlu0.b32.cont [14/16] 0.0, 128
  %1158 = vxpose.xlu0.b32.cont [15/16] 0.0, 128
  %1159 = vxpose.xlu0.b32.end [16/16] 0.0, 128
  %v1160 = vpop.trf.xlu0
  %v1161 = vpop.trf.xlu0
  %v1162 = vpop.trf.xlu0
  %v1163 = vpop.trf.xlu0
  %v1164 = vpop.trf.xlu0
  %v1165 = vpop.trf.xlu0
  %v1166 = vpop.trf.xlu0
  %v1167 = vpop.trf.xlu0
  %v1168 = vpop.trf.xlu0
  %v1169 = vpop.trf.xlu0
  %v1170 = vpop.trf.xlu0
  %v1171 = vpop.trf.xlu0
  %v1172 = vpop.trf.xlu0
  %v1173 = vpop.trf.xlu0
  %v1174 = vpop.trf.xlu0
  %v1175 = vpop.trf.xlu0
  %v1177 = vsel %vm357, %v1160, 0
  %v1180 = vsel %vm357, %v1161, 0
  %1182 = vmatpush.msra.mxu0 0.0
  %1183 = vmatpush.msra.mxu0 0.0
  %1184 = vmatpush.msra.mxu0 0.0
  %1185 = vmatpush.msra.mxu0 0.0
  %1186 = vmatpush.msra.mxu0 0.0
  %1187 = vmatpush.msra.mxu0 0.0
  %1188 = vmatpush.msra.mxu0 0.0
  %1189 = vmatpush.msra.mxu0 0.0
  %1190 = vmatpush.msra.mxu0 0.0
  %1191 = vmatpush.msra.mxu0 0.0
  %1192 = vmatpush.msra.mxu0 0.0
  %1193 = vmatpush.msra.mxu0 0.0
  %1194 = vmatpush.msra.mxu0 0.0
  %1195 = vmatpush.msra.mxu0 0.0
  %1196 = vmatpush.msra.mxu0 0.0
  %1197 = vmatpush.msra.mxu0 %v192
  %1198 = vmatmul.f32.gmra.mxu0 %v1177
  %v1199 = vpop.f32.mrf.mxu0
  %v1200 = vadd.f32 %v44, %v1199
  %1201 = vmatmul.f32.gmra.mxu0 %v1180
  %v1202 = vpop.f32.mrf.mxu0
  %v1203 = vadd.f32 %v45, %v1202
  %1204 = vdwg.mxu0
  %v1205 = vsel %vm387, %v1200, -inf
  %1206 = vmax.xlane.f32.xlu0 %v1205
  %v1207 = vpop.xlane.xlu0 %1206
  %v1208 = vsel %vm387, %v1203, -inf
  %1209 = vmax.xlane.f32.xlu0 %v1208
  %v1210 = vpop.xlane.xlu0 %1209
  %v1211 = vsub.f32 %v1200, %v1207
  %v1212 = vsub.f32 %v1203, %v1210
  %v1213 = vmul.f32 %v1211, 1.442695
  %v1214 = vpow.pop %v1213
  %v1215 = vmul.f32 %v1212, 1.442695
  %v1216 = vpow.pop %v1215
  %v1217 = vmul.f32 %v1214, %v46
  %v1218 = vmul.f32 %v1216, %v47
  %v1219 = vsel %vm387, %v1217, 0.0
  %1220 = vadd.xlane.f32.xlu0 %v1219
  %v1221 = vpop.xlane.xlu0 %1220
  %v1222 = vsel %vm387, %v1218, 0.0
  %1223 = vadd.xlane.f32.xlu0 %v1222
  %v1224 = vpop.xlane.xlu0 %1223
  %vm1225 = vcmp.gt.f32.partialorder %v1221, 0.0
  %vm1226 = vcmp.gt.f32.partialorder %v1224, 0.0
  %v1227 = vsel %vm1225, %v1221, 1.0
  %v1228 = vsel %vm1226, %v1224, 1.0
  %v1229 = vrcp.pop %v1227
  %v1230 = vrcp.pop %v1228
  %v1231 = vmul.f32 %v1217, %v1229
  %v1232 = vmul.f32 %v1218, %v1230
  %v1234 = vsel %vm387, %v284, 0
  %v1237 = vsel %vm387, %v1231, 0
  %v1240 = vsel %vm387, %v1232, 0
  %1242 = vmatpush.xpose.msra.mxu0 0.0
  %1243 = vmatpush.xpose.msra.mxu0 0.0
  %1244 = vmatpush.xpose.msra.mxu0 0.0
  %1245 = vmatpush.xpose.msra.mxu0 0.0
  %1246 = vmatpush.xpose.msra.mxu0 0.0
  %1247 = vmatpush.xpose.msra.mxu0 0.0
  %1248 = vmatpush.xpose.msra.mxu0 0.0
  %1249 = vmatpush.xpose.msra.mxu0 0.0
  %1250 = vmatpush.xpose.msra.mxu0 0.0
  %1251 = vmatpush.xpose.msra.mxu0 0.0
  %1252 = vmatpush.xpose.msra.mxu0 0.0
  %1253 = vmatpush.xpose.msra.mxu0 0.0
  %1254 = vmatpush.xpose.msra.mxu0 0.0
  %1255 = vmatpush.xpose.msra.mxu0 0.0
  %1256 = vmatpush.xpose.msra.mxu0 %v1240
  %1257 = vmatpush.xpose.msra.mxu0 %v1237
  %1258 = vmatmul.f32.gmra.mxu0 %v1234
  %v1259 = vpop.f32.mrf.mxu0
  %v1260 = vadd.f32 0.0, %v1259
  %1261 = vdwg.mxu0
  %v1262 = vld [vmem:[%s567] sm:$0xff]
  %v1263 = vld [vmem:[%s567 + $0x8] sm:$0xff]
  %v1264 = vld [vmem:[%s567 + $0x10] sm:$0xff]
  %v1265 = vld [vmem:[%s567 + $0x18] sm:$0xff]
  %v1267 = vsel %vm357, %v1262, 0
  %v1270 = vsel %vm357, %v1263, 0
  %v1273 = vsel %vm357, %v1264, 0
  %v1276 = vsel %vm357, %v1265, 0
  %1278 = vmatpush.msra.mxu0 0.0
  %1279 = vmatpush.msra.mxu0 0.0
  %1280 = vmatpush.msra.mxu0 0.0
  %1281 = vmatpush.msra.mxu0 0.0
  %1282 = vmatpush.msra.mxu0 0.0
  %1283 = vmatpush.msra.mxu0 0.0
  %1284 = vmatpush.msra.mxu0 0.0
  %1285 = vmatpush.msra.mxu0 0.0
  %1286 = vmatpush.msra.mxu0 0.0
  %1287 = vmatpush.msra.mxu0 0.0
  %1288 = vmatpush.msra.mxu0 0.0
  %1289 = vmatpush.msra.mxu0 0.0
  %1290 = vmatpush.msra.mxu0 0.0
  %1291 = vmatpush.msra.mxu0 0.0
  %1292 = vmatpush.msra.mxu0 0.0
  %1293 = vmatpush.msra.mxu0 %v1260
  %1294 = vmatmul.f32.gmra.mxu0 %v1267
  %v1295 = vpop.f32.mrf.mxu0
  %v1296 = vadd.f32 0.0, %v1295
  %1297 = vmatmul.f32.gmra.mxu0 %v1270
  %v1298 = vpop.f32.mrf.mxu0
  %v1299 = vadd.f32 0.0, %v1298
  %1300 = vmatmul.f32.gmra.mxu0 %v1273
  %v1301 = vpop.f32.mrf.mxu0
  %v1302 = vadd.f32 0.0, %v1301
  %1303 = vmatmul.f32.gmra.mxu0 %v1276
  %v1304 = vpop.f32.mrf.mxu0
  %v1305 = vadd.f32 0.0, %v1304
  %1306 = vdwg.mxu0
  %v1308 = vsel %vm357, %v1140, 0
  %v1311 = vsel %vm357, %v1141, 0
  %v1314 = vsel %vm357, %v1142, 0
  %v1317 = vsel %vm357, %v1143, 0
  %1319 = vmatpush.msra.mxu0 0.0
  %1320 = vmatpush.msra.mxu0 0.0
  %1321 = vmatpush.msra.mxu0 0.0
  %1322 = vmatpush.msra.mxu0 0.0
  %1323 = vmatpush.msra.mxu0 0.0
  %1324 = vmatpush.msra.mxu0 0.0
  %1325 = vmatpush.msra.mxu0 0.0
  %1326 = vmatpush.msra.mxu0 0.0
  %1327 = vmatpush.msra.mxu0 0.0
  %1328 = vmatpush.msra.mxu0 0.0
  %1329 = vmatpush.msra.mxu0 0.0
  %1330 = vmatpush.msra.mxu0 0.0
  %1331 = vmatpush.msra.mxu0 0.0
  %1332 = vmatpush.msra.mxu0 0.0
  %1333 = vmatpush.msra.mxu0 0.0
  %1334 = vmatpush.msra.mxu0 %v1138
  %1335 = vmatmul.f32.gmra.mxu0 %v1308
  %v1336 = vpop.f32.mrf.mxu0
  %v1337 = vadd.f32 %v1296, %v1336
  %1338 = vmatmul.f32.gmra.mxu0 %v1311
  %v1339 = vpop.f32.mrf.mxu0
  %v1340 = vadd.f32 %v1299, %v1339
  %1341 = vmatmul.f32.gmra.mxu0 %v1314
  %v1342 = vpop.f32.mrf.mxu0
  %v1343 = vadd.f32 %v1302, %v1342
  %1344 = vmatmul.f32.gmra.mxu0 %v1317
  %v1345 = vpop.f32.mrf.mxu0
  %v1346 = vadd.f32 %v1305, %v1345
  %1347 = vdwg.mxu0
  %1348 = vxpose.xlu0.b32.start [1/16] %v136, 128
  %1349 = vxpose.xlu0.b32.cont [2/16] 0.0, 128
  %1350 = vxpose.xlu0.b32.cont [3/16] 0.0, 128
  %1351 = vxpose.xlu0.b32.cont [4/16] 0.0, 128
  %1352 = vxpose.xlu0.b32.cont [5/16] 0.0, 128
  %1353 = vxpose.xlu0.b32.cont [6/16] 0.0, 128
  %1354 = vxpose.xlu0.b32.cont [7/16] 0.0, 128
  %1355 = vxpose.xlu0.b32.cont [8/16] 0.0, 128
  %1356 = vxpose.xlu0.b32.cont [9/16] 0.0, 128
  %1357 = vxpose.xlu0.b32.cont [10/16] 0.0, 128
  %1358 = vxpose.xlu0.b32.cont [11/16] 0.0, 128
  %1359 = vxpose.xlu0.b32.cont [12/16] 0.0, 128
  %1360 = vxpose.xlu0.b32.cont [13/16] 0.0, 128
  %1361 = vxpose.xlu0.b32.cont [14/16] 0.0, 128
  %1362 = vxpose.xlu0.b32.cont [15/16] 0.0, 128
  %1363 = vxpose.xlu0.b32.end [16/16] 0.0, 128
  %v1364 = vpop.trf.xlu0
  %v1365 = vpop.trf.xlu0
  %v1366 = vpop.trf.xlu0
  %v1367 = vpop.trf.xlu0
  %v1368 = vpop.trf.xlu0
  %v1369 = vpop.trf.xlu0
  %v1370 = vpop.trf.xlu0
  %v1371 = vpop.trf.xlu0
  %v1372 = vpop.trf.xlu0
  %v1373 = vpop.trf.xlu0
  %v1374 = vpop.trf.xlu0
  %v1375 = vpop.trf.xlu0
  %v1376 = vpop.trf.xlu0
  %v1377 = vpop.trf.xlu0
  %v1378 = vpop.trf.xlu0
  %v1379 = vpop.trf.xlu0
  %v1381 = vsel %vm357, %v1364, 0
  %v1384 = vsel %vm357, %v1365, 0
  %1386 = vmatpush.msra.mxu0 0.0
  %1387 = vmatpush.msra.mxu0 0.0
  %1388 = vmatpush.msra.mxu0 0.0
  %1389 = vmatpush.msra.mxu0 0.0
  %1390 = vmatpush.msra.mxu0 0.0
  %1391 = vmatpush.msra.mxu0 0.0
  %1392 = vmatpush.msra.mxu0 0.0
  %1393 = vmatpush.msra.mxu0 0.0
  %1394 = vmatpush.msra.mxu0 0.0
  %1395 = vmatpush.msra.mxu0 0.0
  %1396 = vmatpush.msra.mxu0 0.0
  %1397 = vmatpush.msra.mxu0 0.0
  %1398 = vmatpush.msra.mxu0 0.0
  %1399 = vmatpush.msra.mxu0 0.0
  %1400 = vmatpush.msra.mxu0 0.0
  %1401 = vmatpush.msra.mxu0 %v228
  %1402 = vmatmul.f32.gmra.mxu0 %v1381
  %v1403 = vpop.f32.mrf.mxu0
  %v1404 = vadd.f32 %v44, %v1403
  %1405 = vmatmul.f32.gmra.mxu0 %v1384
  %v1406 = vpop.f32.mrf.mxu0
  %v1407 = vadd.f32 %v45, %v1406
  %1408 = vdwg.mxu0
  %v1409 = vsel %vm387, %v1404, -inf
  %1410 = vmax.xlane.f32.xlu0 %v1409
  %v1411 = vpop.xlane.xlu0 %1410
  %v1412 = vsel %vm387, %v1407, -inf
  %1413 = vmax.xlane.f32.xlu0 %v1412
  %v1414 = vpop.xlane.xlu0 %1413
  %v1415 = vsub.f32 %v1404, %v1411
  %v1416 = vsub.f32 %v1407, %v1414
  %v1417 = vmul.f32 %v1415, 1.442695
  %v1418 = vpow.pop %v1417
  %v1419 = vmul.f32 %v1416, 1.442695
  %v1420 = vpow.pop %v1419
  %v1421 = vmul.f32 %v1418, %v46
  %v1422 = vmul.f32 %v1420, %v47
  %v1423 = vsel %vm387, %v1421, 0.0
  %1424 = vadd.xlane.f32.xlu0 %v1423
  %v1425 = vpop.xlane.xlu0 %1424
  %v1426 = vsel %vm387, %v1422, 0.0
  %1427 = vadd.xlane.f32.xlu0 %v1426
  %v1428 = vpop.xlane.xlu0 %1427
  %vm1429 = vcmp.gt.f32.partialorder %v1425, 0.0
  %vm1430 = vcmp.gt.f32.partialorder %v1428, 0.0
  %v1431 = vsel %vm1429, %v1425, 1.0
  %v1432 = vsel %vm1430, %v1428, 1.0
  %v1433 = vrcp.pop %v1431
  %v1434 = vrcp.pop %v1432
  %v1435 = vmul.f32 %v1421, %v1433
  %v1436 = vmul.f32 %v1422, %v1434
  %v1438 = vsel %vm387, %v320, 0
  %v1441 = vsel %vm387, %v1435, 0
  %v1444 = vsel %vm387, %v1436, 0
  %1446 = vmatpush.xpose.msra.mxu0 0.0
  %1447 = vmatpush.xpose.msra.mxu0 0.0
  %1448 = vmatpush.xpose.msra.mxu0 0.0
  %1449 = vmatpush.xpose.msra.mxu0 0.0
  %1450 = vmatpush.xpose.msra.mxu0 0.0
  %1451 = vmatpush.xpose.msra.mxu0 0.0
  %1452 = vmatpush.xpose.msra.mxu0 0.0
  %1453 = vmatpush.xpose.msra.mxu0 0.0
  %1454 = vmatpush.xpose.msra.mxu0 0.0
  %1455 = vmatpush.xpose.msra.mxu0 0.0
  %1456 = vmatpush.xpose.msra.mxu0 0.0
  %1457 = vmatpush.xpose.msra.mxu0 0.0
  %1458 = vmatpush.xpose.msra.mxu0 0.0
  %1459 = vmatpush.xpose.msra.mxu0 0.0
  %1460 = vmatpush.xpose.msra.mxu0 %v1444
  %1461 = vmatpush.xpose.msra.mxu0 %v1441
  %1462 = vmatmul.f32.gmra.mxu0 %v1438
  %v1463 = vpop.f32.mrf.mxu0
  %v1464 = vadd.f32 0.0, %v1463
  %1465 = vdwg.mxu0
  %v1466 = vld [vmem:[%s772] sm:$0xff]
  %v1467 = vld [vmem:[%s772 + $0x8] sm:$0xff]
  %v1468 = vld [vmem:[%s772 + $0x10] sm:$0xff]
  %v1469 = vld [vmem:[%s772 + $0x18] sm:$0xff]
  %v1471 = vsel %vm357, %v1466, 0
  %v1474 = vsel %vm357, %v1467, 0
  %v1477 = vsel %vm357, %v1468, 0
  %v1480 = vsel %vm357, %v1469, 0
  %1482 = vmatpush.msra.mxu0 0.0
  %1483 = vmatpush.msra.mxu0 0.0
  %1484 = vmatpush.msra.mxu0 0.0
  %1485 = vmatpush.msra.mxu0 0.0
  %1486 = vmatpush.msra.mxu0 0.0
  %1487 = vmatpush.msra.mxu0 0.0
  %1488 = vmatpush.msra.mxu0 0.0
  %1489 = vmatpush.msra.mxu0 0.0
  %1490 = vmatpush.msra.mxu0 0.0
  %1491 = vmatpush.msra.mxu0 0.0
  %1492 = vmatpush.msra.mxu0 0.0
  %1493 = vmatpush.msra.mxu0 0.0
  %1494 = vmatpush.msra.mxu0 0.0
  %1495 = vmatpush.msra.mxu0 0.0
  %1496 = vmatpush.msra.mxu0 0.0
  %1497 = vmatpush.msra.mxu0 %v1464
  %1498 = vmatmul.f32.gmra.mxu0 %v1471
  %v1499 = vpop.f32.mrf.mxu0
  %v1500 = vadd.f32 0.0, %v1499
  %1501 = vmatmul.f32.gmra.mxu0 %v1474
  %v1502 = vpop.f32.mrf.mxu0
  %v1503 = vadd.f32 0.0, %v1502
  %1504 = vmatmul.f32.gmra.mxu0 %v1477
  %v1505 = vpop.f32.mrf.mxu0
  %v1506 = vadd.f32 0.0, %v1505
  %1507 = vmatmul.f32.gmra.mxu0 %v1480
  %v1508 = vpop.f32.mrf.mxu0
  %v1509 = vadd.f32 0.0, %v1508
  %1510 = vdwg.mxu0
  %v1511 = vadd.f32 %v1337, %v1500
  %v1512 = vadd.f32 %v1340, %v1503
  %v1513 = vadd.f32 %v1343, %v1506
  %v1514 = vadd.f32 %v1346, %v1509
  %1515 = vxpose.xlu0.b32.start [1/16] %v139, 128
  %1516 = vxpose.xlu0.b32.cont [2/16] 0.0, 128
  %1517 = vxpose.xlu0.b32.cont [3/16] 0.0, 128
  %1518 = vxpose.xlu0.b32.cont [4/16] 0.0, 128
  %1519 = vxpose.xlu0.b32.cont [5/16] 0.0, 128
  %1520 = vxpose.xlu0.b32.cont [6/16] 0.0, 128
  %1521 = vxpose.xlu0.b32.cont [7/16] 0.0, 128
  %1522 = vxpose.xlu0.b32.cont [8/16] 0.0, 128
  %1523 = vxpose.xlu0.b32.cont [9/16] 0.0, 128
  %1524 = vxpose.xlu0.b32.cont [10/16] 0.0, 128
  %1525 = vxpose.xlu0.b32.cont [11/16] 0.0, 128
  %1526 = vxpose.xlu0.b32.cont [12/16] 0.0, 128
  %1527 = vxpose.xlu0.b32.cont [13/16] 0.0, 128
  %1528 = vxpose.xlu0.b32.cont [14/16] 0.0, 128
  %1529 = vxpose.xlu0.b32.cont [15/16] 0.0, 128
  %1530 = vxpose.xlu0.b32.end [16/16] 0.0, 128
  %v1531 = vpop.trf.xlu0
  %v1532 = vpop.trf.xlu0
  %v1533 = vpop.trf.xlu0
  %v1534 = vpop.trf.xlu0
  %v1535 = vpop.trf.xlu0
  %v1536 = vpop.trf.xlu0
  %v1537 = vpop.trf.xlu0
  %v1538 = vpop.trf.xlu0
  %v1539 = vpop.trf.xlu0
  %v1540 = vpop.trf.xlu0
  %v1541 = vpop.trf.xlu0
  %v1542 = vpop.trf.xlu0
  %v1543 = vpop.trf.xlu0
  %v1544 = vpop.trf.xlu0
  %v1545 = vpop.trf.xlu0
  %v1546 = vpop.trf.xlu0
  %v1548 = vsel %vm357, %v1531, 0
  %v1551 = vsel %vm357, %v1532, 0
  %1553 = vmatpush.msra.mxu0 0.0
  %1554 = vmatpush.msra.mxu0 0.0
  %1555 = vmatpush.msra.mxu0 0.0
  %1556 = vmatpush.msra.mxu0 0.0
  %1557 = vmatpush.msra.mxu0 0.0
  %1558 = vmatpush.msra.mxu0 0.0
  %1559 = vmatpush.msra.mxu0 0.0
  %1560 = vmatpush.msra.mxu0 0.0
  %1561 = vmatpush.msra.mxu0 0.0
  %1562 = vmatpush.msra.mxu0 0.0
  %1563 = vmatpush.msra.mxu0 0.0
  %1564 = vmatpush.msra.mxu0 0.0
  %1565 = vmatpush.msra.mxu0 0.0
  %1566 = vmatpush.msra.mxu0 0.0
  %1567 = vmatpush.msra.mxu0 0.0
  %1568 = vmatpush.msra.mxu0 %v231
  %1569 = vmatmul.f32.gmra.mxu0 %v1548
  %v1570 = vpop.f32.mrf.mxu0
  %v1571 = vadd.f32 %v44, %v1570
  %1572 = vmatmul.f32.gmra.mxu0 %v1551
  %v1573 = vpop.f32.mrf.mxu0
  %v1574 = vadd.f32 %v45, %v1573
  %1575 = vdwg.mxu0
  %v1576 = vsel %vm387, %v1571, -inf
  %1577 = vmax.xlane.f32.xlu0 %v1576
  %v1578 = vpop.xlane.xlu0 %1577
  %v1579 = vsel %vm387, %v1574, -inf
  %1580 = vmax.xlane.f32.xlu0 %v1579
  %v1581 = vpop.xlane.xlu0 %1580
  %v1582 = vsub.f32 %v1571, %v1578
  %v1583 = vsub.f32 %v1574, %v1581
  %v1584 = vmul.f32 %v1582, 1.442695
  %v1585 = vpow.pop %v1584
  %v1586 = vmul.f32 %v1583, 1.442695
  %v1587 = vpow.pop %v1586
  %v1588 = vmul.f32 %v1585, %v46
  %v1589 = vmul.f32 %v1587, %v47
  %v1590 = vsel %vm387, %v1588, 0.0
  %1591 = vadd.xlane.f32.xlu0 %v1590
  %v1592 = vpop.xlane.xlu0 %1591
  %v1593 = vsel %vm387, %v1589, 0.0
  %1594 = vadd.xlane.f32.xlu0 %v1593
  %v1595 = vpop.xlane.xlu0 %1594
  %vm1596 = vcmp.gt.f32.partialorder %v1592, 0.0
  %vm1597 = vcmp.gt.f32.partialorder %v1595, 0.0
  %v1598 = vsel %vm1596, %v1592, 1.0
  %v1599 = vsel %vm1597, %v1595, 1.0
  %v1600 = vrcp.pop %v1598
  %v1601 = vrcp.pop %v1599
  %v1602 = vmul.f32 %v1588, %v1600
  %v1603 = vmul.f32 %v1589, %v1601
  %v1605 = vsel %vm387, %v323, 0
  %v1608 = vsel %vm387, %v1602, 0
  %v1611 = vsel %vm387, %v1603, 0
  %1613 = vmatpush.xpose.msra.mxu0 0.0
  %1614 = vmatpush.xpose.msra.mxu0 0.0
  %1615 = vmatpush.xpose.msra.mxu0 0.0
  %1616 = vmatpush.xpose.msra.mxu0 0.0
  %1617 = vmatpush.xpose.msra.mxu0 0.0
  %1618 = vmatpush.xpose.msra.mxu0 0.0
  %1619 = vmatpush.xpose.msra.mxu0 0.0
  %1620 = vmatpush.xpose.msra.mxu0 0.0
  %1621 = vmatpush.xpose.msra.mxu0 0.0
  %1622 = vmatpush.xpose.msra.mxu0 0.0
  %1623 = vmatpush.xpose.msra.mxu0 0.0
  %1624 = vmatpush.xpose.msra.mxu0 0.0
  %1625 = vmatpush.xpose.msra.mxu0 0.0
  %1626 = vmatpush.xpose.msra.mxu0 0.0
  %1627 = vmatpush.xpose.msra.mxu0 %v1611
  %1628 = vmatpush.xpose.msra.mxu0 %v1608
  %1629 = vmatmul.f32.gmra.mxu0 %v1605
  %v1630 = vpop.f32.mrf.mxu0
  %v1631 = vadd.f32 0.0, %v1630
  %1632 = vdwg.mxu0
  %v1633 = vld [vmem:[%s940] sm:$0xff]
  %v1634 = vld [vmem:[%s940 + $0x8] sm:$0xff]
  %v1635 = vld [vmem:[%s940 + $0x10] sm:$0xff]
  %v1636 = vld [vmem:[%s940 + $0x18] sm:$0xff]
  %v1638 = vsel %vm357, %v1633, 0
  %v1641 = vsel %vm357, %v1634, 0
  %v1644 = vsel %vm357, %v1635, 0
  %v1647 = vsel %vm357, %v1636, 0
  %1649 = vmatpush.msra.mxu0 0.0
  %1650 = vmatpush.msra.mxu0 0.0
  %1651 = vmatpush.msra.mxu0 0.0
  %1652 = vmatpush.msra.mxu0 0.0
  %1653 = vmatpush.msra.mxu0 0.0
  %1654 = vmatpush.msra.mxu0 0.0
  %1655 = vmatpush.msra.mxu0 0.0
  %1656 = vmatpush.msra.mxu0 0.0
  %1657 = vmatpush.msra.mxu0 0.0
  %1658 = vmatpush.msra.mxu0 0.0
  %1659 = vmatpush.msra.mxu0 0.0
  %1660 = vmatpush.msra.mxu0 0.0
  %1661 = vmatpush.msra.mxu0 0.0
  %1662 = vmatpush.msra.mxu0 0.0
  %1663 = vmatpush.msra.mxu0 0.0
  %1664 = vmatpush.msra.mxu0 %v1631
  %1665 = vmatmul.f32.gmra.mxu0 %v1638
  %v1666 = vpop.f32.mrf.mxu0
  %v1667 = vadd.f32 0.0, %v1666
  %1668 = vmatmul.f32.gmra.mxu0 %v1641
  %v1669 = vpop.f32.mrf.mxu0
  %v1670 = vadd.f32 0.0, %v1669
  %1671 = vmatmul.f32.gmra.mxu0 %v1644
  %v1672 = vpop.f32.mrf.mxu0
  %v1673 = vadd.f32 0.0, %v1672
  %1674 = vmatmul.f32.gmra.mxu0 %v1647
  %v1675 = vpop.f32.mrf.mxu0
  %v1676 = vadd.f32 0.0, %v1675
  %1677 = vdwg.mxu0
  %v1678 = vadd.f32 %v1511, %v1667
  %v1679 = vadd.f32 %v1512, %v1670
  %v1680 = vadd.f32 %v1513, %v1673
  %v1681 = vadd.f32 %v1514, %v1676
  %v1682 = vld [vmem:[%s10] sm:$0xff]
  %v1683 = vld [vmem:[%s10 + $0x8] sm:$0xff]
  %v1684 = vld [vmem:[%s10 + $0x10] sm:$0xff]
  %v1685 = vld [vmem:[%s10 + $0x18] sm:$0xff]
  %1687 = vset.pattern.permute.xlu0 0
  %1688 = vperm.xlu0 %1687, %v1682
  %v1689 = vpop.permute.xlu0 %1688
  %1692 = vset.pattern.permute.xlu0 0
  %1693 = vperm.xlu0 %1692, %v1683
  %v1694 = vpop.permute.xlu0 %1693
  %1697 = vset.pattern.permute.xlu0 0
  %1698 = vperm.xlu0 %1697, %v1684
  %v1699 = vpop.permute.xlu0 %1698
  %1702 = vset.pattern.permute.xlu0 0
  %1703 = vperm.xlu0 %1702, %v1685
  %v1704 = vpop.permute.xlu0 %1703
  %v1706 = vadd.f32 %v1678, %v1689
  %v1707 = vadd.f32 %v1679, %v1694
  %v1708 = vadd.f32 %v1680, %v1699
  %v1709 = vadd.f32 %v1681, %v1704
  %s1710 = scalar_lea.vmem %s13, 32
  %1711 = vst.msk [vmem:[%s1710] sm:$0xff] %vm387, %v1706
  %1712 = vst.msk [vmem:[%s1710 + $0x8] sm:$0xff] %vm387, %v1707
  %1713 = vst.msk [vmem:[%s1710 + $0x10] sm:$0xff] %vm387, %v1708
  %1714 = vst.msk [vmem:[%s1710 + $0x18] sm:$0xff] %vm387, %v1709
  // Predicated region
  $region54: #{sparse_attention_forward.1} parent=0 // pred_check
    _
  $region55: #{sparse_attention_forward.1} parent=0 // pred_check_branch
    %1716 = sbr.rel (0) target = $region57
  $region56: #{sparse_attention_forward.1} parent=0 // pred_region
    _
  $region57: #{sparse_attention_forward.1} parent=0 // pred_fallthru
    _
  // Predicated region
  $region58: #{sparse_attention_forward.1} parent=0 // pred_check
    _
  $region59: #{sparse_attention_forward.1} parent=0 // pred_check_branch
    %1718 = sbr.rel (0) target = $region61
  $region60: #{sparse_attention_forward.1} parent=0 // pred_region
    _
  $region61: #{sparse_attention_forward.1} parent=0 // pred_fallthru
    _

</llo_original>
